<compile_context>
chip_gen: v5e
topology: v5e:2x2
jax: 0.10.0
libtpu: 0.0.40
codegen_flags: <defaults>
</compile_context>

<pallas_src>
import functools

import jax
import jax.numpy as jnp
from jax import lax
from jax.experimental import pallas as pl
from jax.experimental.pallas import tpu as pltpu

BN_EPS = 1e-3          # nn.BatchNorm2d(eps=0.001)
LEAKY_SLOPE = 0.1      # nn.LeakyReLU(0.1)
LANES = 128


def _round_up(x, m):
    return (x + m - 1) // m * m


def _pick_row_tile(h, cap=32):
    """Largest row tile <= cap that divides h (keeps blocks modest, grid clean)."""
    for t in (32, 16, 8, 4, 2, 1):
        if t <= cap and h % t == 0:
            return t
    return 1


def _fold_bn(w, bias, gamma, beta):
    """Fold conv bias + eval-mode BatchNorm into the weights and one shift.

    TODO(synk): BatchNorm2d is modelled in eval mode with freshly-initialised
    running stats (mean=0, var=1); training-mode batch statistics are not modelled.
    """
    scale = gamma / jnp.sqrt(1.0 + BN_EPS)
    w_folded = w * scale[None, None, None, :]
    shift = bias * scale + beta
    return w_folded, shift


# ------------------------------ Pallas kernels ------------------------------

def _make_conv_kernel(kh, kw, th, w_out, c_in, c_pad, apply_act):
    """Fused stride-1 Conv2d + (folded) BN + LeakyReLU over one (batch, row-tile)."""
    def kernel(x_ref, w_ref, s_ref, o_ref):
        row0 = pl.program_id(1) * th
        acc = jnp.zeros((th * w_out, c_pad), jnp.float32)
        for dh in range(kh):
            # Leading-dim (row) slice of the VMEM-resident padded image.
            rows = x_ref[0, pl.ds(row0 + dh, th), :, :].astype(jnp.float32)
            for dw in range(kw):
                xt = rows[:, dw:dw + w_out, :].reshape(th * w_out, c_in)
                acc += jnp.dot(xt, w_ref[dh, dw].astype(jnp.float32),
                               preferred_element_type=jnp.float32)
        y = acc + s_ref[...]                           # folded bias + BN shift
        if apply_act:
            y = jnp.where(y > 0, y, LEAKY_SLOPE * y)   # LeakyReLU(0.1)
        o_ref[0] = y.reshape(th, w_out, c_pad).astype(o_ref.dtype)
    return kernel


def _make_conv_transpose_kernel(s, th, w_in, c_in, c_pad, apply_act):
    """Fused ConvTranspose2d (kernel == stride, pad 0) + BN + LeakyReLU."""
    def kernel(x_ref, w_ref, s_ref, o_ref):
        xf = x_ref[0].reshape(th * w_in, c_in)          # bf16, native MXU path
        for di in range(s):
            cols = []
            for dj in range(s):
                y = jnp.dot(xf, w_ref[di, dj], preferred_element_type=jnp.float32)
                y = y + s_ref[...]
                if apply_act:
                    y = jnp.where(y > 0, y, LEAKY_SLOPE * y)
                cols.append(y)
            # 128-aligned lane concat -> (th*w_in, s*c_pad); stored lane-dense.
            row = jnp.concatenate(cols, axis=-1) if s > 1 else cols[0]
            o_ref[0, :, di, :, :] = row.reshape(th, w_in, s * c_pad).astype(o_ref.dtype)
    return kernel


# --------------------------------- wrappers ---------------------------------

@functools.partial(jax.jit, static_argnames=("stride", "padding", "apply_act"))
def conv_bn_act(x_nhwc, w, bias, gamma, beta, *, stride, padding, apply_act):
    """Conv2d(k, stride=1, padding=p) + folded BN + LeakyReLU, one pallas_call."""
    if stride != 1:
        # TODO(synk): strided (stride > 1) Conv2d is not lowered to Pallas here.
        raise NotImplementedError("conv_bn_act supports stride == 1 only")
    B, H, W, Cin = x_nhwc.shape
    kh, kw, _, Cout = w.shape
    p = padding
    Hp, Wp = H + 2 * p, W + 2 * p
    Hout, Wout = Hp - kh + 1, Wp - kw + 1
    Cp = _round_up(Cout, LANES)

    w_f, shift = _fold_bn(w, bias, gamma, beta)
    w_pad = jnp.zeros((kh, kw, Cin, Cp), jnp.bfloat16)
    w_pad = w_pad.at[..., :Cout].set(w_f.astype(jnp.bfloat16))
    shift_pad = jnp.zeros((1, Cp), jnp.float32).at[0, :Cout].set(shift.astype(jnp.float32))

    x_pad = jnp.pad(x_nhwc, ((0, 0), (p, p), (p, p), (0, 0))).astype(jnp.bfloat16)

    th = _pick_row_tile(Hout)
    grid = (B, Hout // th)
    kernel = _make_conv_kernel(kh, kw, th, Wout, Cin, Cp, apply_act)

    out = pl.pallas_call(
        kernel,
        out_shape=jax.ShapeDtypeStruct((B, Hout, Wout, Cp), jnp.float32),
        grid=grid,
        in_specs=[
            # Full padded image per batch item; the block index ignores the row
            # axis, so the activation stays resident in VMEM across row steps.
            pl.BlockSpec((1, Hp, Wp, Cin), lambda b, r: (b, 0, 0, 0)),
            pl.BlockSpec((kh, kw, Cin, Cp), lambda b, r: (0, 0, 0, 0)),
            pl.BlockSpec((1, Cp), lambda b, r: (0, 0)),
        ],
        out_specs=pl.BlockSpec((1, th, Wout, Cp), lambda b, r: (b, r, 0, 0)),
        compiler_params=pltpu.CompilerParams(
            dimension_semantics=("parallel", "parallel")),
    )(x_pad, w_pad, shift_pad)
    return out[..., :Cout]


@functools.partial(jax.jit, static_argnames=("stride", "padding", "apply_act"))
def conv_transpose_bn_act(x_nhwc, w, bias, gamma, beta, *, stride, padding, apply_act):
    """ConvTranspose2d(kernel == stride, padding=0) + folded BN + LeakyReLU."""
    s = w.shape[0]
    if w.shape[1] != s or stride != s or padding != 0:
        # TODO(synk): general ConvTranspose2d (kernel != stride or padding != 0)
        # is not lowered to Pallas here.
        raise NotImplementedError("conv_transpose_bn_act needs kernel == stride, padding == 0")
    B, H, W, Cin = x_nhwc.shape
    Cout = w.shape[-1]
    Cp = _round_up(Cout, LANES)

    w_f, shift = _fold_bn(w, bias, gamma, beta)
    w_pad = jnp.zeros((s, s, Cin, Cp), jnp.bfloat16)
    w_pad = w_pad.at[..., :Cout].set(w_f.astype(jnp.bfloat16))
    shift_pad = jnp.zeros((1, Cp), jnp.float32).at[0, :Cout].set(shift.astype(jnp.float32))

    x_b = x_nhwc.astype(jnp.bfloat16)
    th = _pick_row_tile(H)
    grid = (B, H // th)
    kernel = _make_conv_transpose_kernel(s, th, W, Cin, Cp, apply_act)

    out = pl.pallas_call(
        kernel,
        out_shape=jax.ShapeDtypeStruct((B, H, s, W, s * Cp), jnp.float32),
        grid=grid,
        in_specs=[
            pl.BlockSpec((1, th, W, Cin), lambda b, r: (b, r, 0, 0)),
            pl.BlockSpec((s, s, Cin, Cp), lambda b, r: (0, 0, 0, 0)),
            pl.BlockSpec((1, Cp), lambda b, r: (0, 0)),
        ],
        out_specs=pl.BlockSpec((1, th, s, W, s * Cp), lambda b, r: (b, r, 0, 0, 0)),
        compiler_params=pltpu.CompilerParams(
            dimension_semantics=("parallel", "parallel")),
    )(x_b, w_pad, shift_pad)
    # (B, H, s, W, s*Cp) -> (B, s*H, s*W, Cp): pure adjacent-dim reshape, no transpose.
    return out.reshape(B, s * H, s * W, Cp)[..., :Cout]


# ----------------------------- CNNBlock (module) ----------------------------

def init_cnn_block(key, in_channels, out_channels, kernel_size, stride, padding,
                   transposed=False, apply_act=True):
    kw_, kb, kg, kbe = jax.random.split(key, 4)
    k = kernel_size
    std = 1.0 / jnp.sqrt(float(in_channels * k * k))
    return {
        "w": (std * jax.random.normal(kw_, (k, k, in_channels, out_channels))).astype(jnp.float32),
        "b": (std * jax.random.normal(kb, (out_channels,))).astype(jnp.float32),
        "gamma": (1.0 + 0.1 * jax.random.normal(kg, (out_channels,))).astype(jnp.float32),
        "beta": (0.1 * jax.random.normal(kbe, (out_channels,))).astype(jnp.float32),
        "cfg": dict(kernel_size=k, stride=stride, padding=padding,
                    transposed=transposed, apply_act=apply_act),
    }


def cnn_block_forward(params, x_nchw):
    """Pallas forward for CNNBlock; input/output are NCHW like the PyTorch module."""
    cfg = params["cfg"]
    x = jnp.transpose(x_nchw, (0, 2, 3, 1))            # NCHW -> NHWC
    fn = conv_transpose_bn_act if cfg["transposed"] else conv_bn_act
    y = fn(x, params["w"], params["b"], params["gamma"], params["beta"],
           stride=cfg["stride"], padding=cfg["padding"], apply_act=cfg["apply_act"])
    return jnp.transpose(y, (0, 3, 1, 2))              # NHWC -> NCHW


def cnn_block_reference(params, x_nchw):
    """Pure-JAX f32 reference (conv -> +bias -> eval BN -> LeakyReLU)."""
    cfg = params["cfg"]
    w, b = params["w"], params["b"]
    x = jnp.transpose(x_nchw, (0, 2, 3, 1)).astype(jnp.float32)
    if cfg["transposed"]:
        s = cfg["stride"]
        B, H, W, _ = x.shape
        Cout = w.shape[-1]
        y = jnp.einsum("bhwc,ijcd->bhiwjd", x, w).reshape(B, s * H, s * W, Cout) + b
    else:
        p = cfg["padding"]
        y = lax.conv_general_dilated(
            x, w, window_strides=(cfg["stride"], cfg["stride"]),
            padding=[(p, p), (p, p)],
            dimension_numbers=("NHWC", "HWIO", "NHWC")) + b
    scale = params["gamma"] / jnp.sqrt(1.0 + BN_EPS)
    y = y * scale + params["beta"]
    if cfg["apply_act"]:
        y = jnp.where(y > 0, y, LEAKY_SLOPE * y)
    return jnp.transpose(y, (0, 3, 1, 2))


# ----------------------------------- main ------------------------------------

if __name__ == "__main__":
    key = jax.random.PRNGKey(0)
    kx, k1, k2, k3 = jax.random.split(key, 4)

    B, Cin, H, W = 2, 4, 16, 16
    x = jax.random.normal(kx, (B, Cin, H, W), dtype=jnp.float32)

    blocks = [
        # CNNBlock(4, 8, kernel=3, stride=1, padding=1)                  -> (2, 8, 16, 16)
        (init_cnn_block(k1, Cin, 8, 3, 1, 1, transposed=False, apply_act=True),
         (B, 8, H, W)),
        # CNNBlock(4, 8, kernel=2, stride=2, padding=0, transposed=True) -> (2, 8, 32, 32)
        (init_cnn_block(k2, Cin, 8, 2, 2, 0, transposed=True, apply_act=True),
         (B, 8, 2 * H, 2 * W)),
        # CNNBlock(4, 3, kernel=1, stride=1, padding=0, apply_act=False) -> (2, 3, 16, 16)
        (init_cnn_block(k3, Cin, 3, 1, 1, 0, transposed=False, apply_act=False),
         (B, 3, H, W)),
    ]

    for params, want_shape in blocks:
        out = jax.block_until_ready(cnn_block_forward(params, x))
        assert out.shape == want_shape, (out.shape, want_shape)
        ref = cnn_block_reference(params, x)
        err = float(jnp.max(jnp.abs(out - ref)))
        # bf16 operands with f32 accumulation -> small quantisation error vs f32 ref.
        assert err < 0.1, f"max abs err {err} too large"

    print("KERNEL_OK")
</pallas_src>

<mosaic_0001>
module attributes {stable_mosaic.version = 11 : i64} {
  func.func @kernel(%arg0: i32, %arg1: i32, %arg2: memref<1x18x18x4xbf16, #tpu.memory_space<vmem>>, %arg3: memref<3x3x4x128xbf16, #tpu.memory_space<vmem>>, %arg4: memref<1x128xf32, #tpu.memory_space<vmem>>, %arg5: memref<1x16x16x128xf32, #tpu.memory_space<vmem>>) attributes {dimension_semantics = [#tpu.dimension_semantics<parallel>, #tpu.dimension_semantics<parallel>], iteration_bounds = array<i64: 2, 1>, scalar_prefetch = 0 : i64, scratch_operands = 0 : i64, tpu.core_type = #tpu.core_type<tc>, window_params = [{transform_indices = @transform_0, window_bounds = array<i64: 1, 18, 18, 4>}, {pipeline_mode = #tpu.pipeline_mode<synchronous>, transform_indices = @transform_1, window_bounds = array<i64: 3, 3, 4, 128>}, {pipeline_mode = #tpu.pipeline_mode<synchronous>, transform_indices = @transform_2, window_bounds = array<i64: 1, 128>}, {transform_indices = @transform_3, window_bounds = array<i64: 1, 16, 16, 128>}]} {
    %c16_i32 = arith.constant 16 : i32
    %0 = arith.muli %arg1, %c16_i32 : i32
    %cst = arith.constant 0.000000e+00 : f32
    %1 = vector.broadcast %cst : f32 to vector<256x128xf32>
    %c0_i32 = arith.constant 0 : i32
    %2 = arith.addi %0, %c0_i32 : i32
    %c0 = arith.constant 0 : index
    %3 = arith.index_cast %2 : i32 to index
    %c0_0 = arith.constant 0 : index
    %c0_1 = arith.constant 0 : index
    %4 = vector.load %arg2[%c0, %3, %c0_0, %c0_1] : memref<1x18x18x4xbf16, #tpu.memory_space<vmem>>, vector<1x16x18x4xbf16>
    %5 = vector.shape_cast %4 : vector<1x16x18x4xbf16> to vector<16x18x4xbf16>
    %6 = arith.extf %5 : vector<16x18x4xbf16> to vector<16x18x4xf32>
    %7 = vector.extract_strided_slice %6 {offsets = [0, 0, 0], sizes = [16, 16, 4], strides = [1, 1, 1]} : vector<16x18x4xf32> to vector<16x16x4xf32>
    %8 = vector.shape_cast %7 : vector<16x16x4xf32> to vector<256x4xf32>
    %c0_2 = arith.constant 0 : index
    %c0_3 = arith.constant 0 : index
    %c0_4 = arith.constant 0 : index
    %c0_5 = arith.constant 0 : index
    %9 = vector.load %arg3[%c0_2, %c0_3, %c0_4, %c0_5] : memref<3x3x4x128xbf16, #tpu.memory_space<vmem>>, vector<1x1x4x128xbf16>
    %10 = vector.shape_cast %9 : vector<1x1x4x128xbf16> to vector<4x128xbf16>
    %11 = arith.extf %10 : vector<4x128xbf16> to vector<4x128xf32>
    %cst_6 = arith.constant dense<0.000000e+00> : vector<256x128xf32>
    %12 = tpu.matmul %8, %11, %cst_6 {dimension_numbers = #tpu.dot_dimension_numbers<[1], [0], [0], [1], [0, 0, 1, 1], [], []>} : vector<256x4xf32>, vector<4x128xf32>, vector<256x128xf32> -> vector<256x128xf32>
    %13 = arith.addf %1, %12 : vector<256x128xf32>
    %14 = vector.extract_strided_slice %6 {offsets = [0, 1, 0], sizes = [16, 16, 4], strides = [1, 1, 1]} : vector<16x18x4xf32> to vector<16x16x4xf32>
    %15 = vector.shape_cast %14 : vector<16x16x4xf32> to vector<256x4xf32>
    %c0_7 = arith.constant 0 : index
    %c1 = arith.constant 1 : index
    %c0_8 = arith.constant 0 : index
    %c0_9 = arith.constant 0 : index
    %16 = vector.load %arg3[%c0_7, %c1, %c0_8, %c0_9] : memref<3x3x4x128xbf16, #tpu.memory_space<vmem>>, vector<1x1x4x128xbf16>
    %17 = vector.shape_cast %16 : vector<1x1x4x128xbf16> to vector<4x128xbf16>
    %18 = arith.extf %17 : vector<4x128xbf16> to vector<4x128xf32>
    %cst_10 = arith.constant dense<0.000000e+00> : vector<256x128xf32>
    %19 = tpu.matmul %15, %18, %cst_10 {dimension_numbers = #tpu.dot_dimension_numbers<[1], [0], [0], [1], [0, 0, 1, 1], [], []>} : vector<256x4xf32>, vector<4x128xf32>, vector<256x128xf32> -> vector<256x128xf32>
    %20 = arith.addf %13, %19 : vector<256x128xf32>
    %21 = vector.extract_strided_slice %6 {offsets = [0, 2, 0], sizes = [16, 16, 4], strides = [1, 1, 1]} : vector<16x18x4xf32> to vector<16x16x4xf32>
    %22 = vector.shape_cast %21 : vector<16x16x4xf32> to vector<256x4xf32>
    %c0_11 = arith.constant 0 : index
    %c2 = arith.constant 2 : index
    %c0_12 = arith.constant 0 : index
    %c0_13 = arith.constant 0 : index
    %23 = vector.load %arg3[%c0_11, %c2, %c0_12, %c0_13] : memref<3x3x4x128xbf16, #tpu.memory_space<vmem>>, vector<1x1x4x128xbf16>
    %24 = vector.shape_cast %23 : vector<1x1x4x128xbf16> to vector<4x128xbf16>
    %25 = arith.extf %24 : vector<4x128xbf16> to vector<4x128xf32>
    %cst_14 = arith.constant dense<0.000000e+00> : vector<256x128xf32>
    %26 = tpu.matmul %22, %25, %cst_14 {dimension_numbers = #tpu.dot_dimension_numbers<[1], [0], [0], [1], [0, 0, 1, 1], [], []>} : vector<256x4xf32>, vector<4x128xf32>, vector<256x128xf32> -> vector<256x128xf32>
    %27 = arith.addf %20, %26 : vector<256x128xf32>
    %c1_i32 = arith.constant 1 : i32
    %28 = arith.addi %0, %c1_i32 : i32
    %c0_15 = arith.constant 0 : index
    %29 = arith.index_cast %28 : i32 to index
    %c0_16 = arith.constant 0 : index
    %c0_17 = arith.constant 0 : index
    %30 = vector.load %arg2[%c0_15, %29, %c0_16, %c0_17] : memref<1x18x18x4xbf16, #tpu.memory_space<vmem>>, vector<1x16x18x4xbf16>
    %31 = vector.shape_cast %30 : vector<1x16x18x4xbf16> to vector<16x18x4xbf16>
    %32 = arith.extf %31 : vector<16x18x4xbf16> to vector<16x18x4xf32>
    %33 = vector.extract_strided_slice %32 {offsets = [0, 0, 0], sizes = [16, 16, 4], strides = [1, 1, 1]} : vector<16x18x4xf32> to vector<16x16x4xf32>
    %34 = vector.shape_cast %33 : vector<16x16x4xf32> to vector<256x4xf32>
    %c1_18 = arith.constant 1 : index
    %c0_19 = arith.constant 0 : index
    %c0_20 = arith.constant 0 : index
    %c0_21 = arith.constant 0 : index
    %35 = vector.load %arg3[%c1_18, %c0_19, %c0_20, %c0_21] : memref<3x3x4x128xbf16, #tpu.memory_space<vmem>>, vector<1x1x4x128xbf16>
    %36 = vector.shape_cast %35 : vector<1x1x4x128xbf16> to vector<4x128xbf16>
    %37 = arith.extf %36 : vector<4x128xbf16> to vector<4x128xf32>
    %cst_22 = arith.constant dense<0.000000e+00> : vector<256x128xf32>
    %38 = tpu.matmul %34, %37, %cst_22 {dimension_numbers = #tpu.dot_dimension_numbers<[1], [0], [0], [1], [0, 0, 1, 1], [], []>} : vector<256x4xf32>, vector<4x128xf32>, vector<256x128xf32> -> vector<256x128xf32>
    %39 = arith.addf %27, %38 : vector<256x128xf32>
    %40 = vector.extract_strided_slice %32 {offsets = [0, 1, 0], sizes = [16, 16, 4], strides = [1, 1, 1]} : vector<16x18x4xf32> to vector<16x16x4xf32>
    %41 = vector.shape_cast %40 : vector<16x16x4xf32> to vector<256x4xf32>
    %c1_23 = arith.constant 1 : index
    %c1_24 = arith.constant 1 : index
    %c0_25 = arith.constant 0 : index
    %c0_26 = arith.constant 0 : index
    %42 = vector.load %arg3[%c1_23, %c1_24, %c0_25, %c0_26] : memref<3x3x4x128xbf16, #tpu.memory_space<vmem>>, vector<1x1x4x128xbf16>
    %43 = vector.shape_cast %42 : vector<1x1x4x128xbf16> to vector<4x128xbf16>
    %44 = arith.extf %43 : vector<4x128xbf16> to vector<4x128xf32>
    %cst_27 = arith.constant dense<0.000000e+00> : vector<256x128xf32>
    %45 = tpu.matmul %41, %44, %cst_27 {dimension_numbers = #tpu.dot_dimension_numbers<[1], [0], [0], [1], [0, 0, 1, 1], [], []>} : vector<256x4xf32>, vector<4x128xf32>, vector<256x128xf32> -> vector<256x128xf32>
    %46 = arith.addf %39, %45 : vector<256x128xf32>
    %47 = vector.extract_strided_slice %32 {offsets = [0, 2, 0], sizes = [16, 16, 4], strides = [1, 1, 1]} : vector<16x18x4xf32> to vector<16x16x4xf32>
    %48 = vector.shape_cast %47 : vector<16x16x4xf32> to vector<256x4xf32>
    %c1_28 = arith.constant 1 : index
    %c2_29 = arith.constant 2 : index
    %c0_30 = arith.constant 0 : index
    %c0_31 = arith.constant 0 : index
    %49 = vector.load %arg3[%c1_28, %c2_29, %c0_30, %c0_31] : memref<3x3x4x128xbf16, #tpu.memory_space<vmem>>, vector<1x1x4x128xbf16>
    %50 = vector.shape_cast %49 : vector<1x1x4x128xbf16> to vector<4x128xbf16>
    %51 = arith.extf %50 : vector<4x128xbf16> to vector<4x128xf32>
    %cst_32 = arith.constant dense<0.000000e+00> : vector<256x128xf32>
    %52 = tpu.matmul %48, %51, %cst_32 {dimension_numbers = #tpu.dot_dimension_numbers<[1], [0], [0], [1], [0, 0, 1, 1], [], []>} : vector<256x4xf32>, vector<4x128xf32>, vector<256x128xf32> -> vector<256x128xf32>
    %53 = arith.addf %46, %52 : vector<256x128xf32>
    %c2_i32 = arith.constant 2 : i32
    %54 = arith.addi %0, %c2_i32 : i32
    %c0_33 = arith.constant 0 : index
    %55 = arith.index_cast %54 : i32 to index
    %c0_34 = arith.constant 0 : index
    %c0_35 = arith.constant 0 : index
    %56 = vector.load %arg2[%c0_33, %55, %c0_34, %c0_35] : memref<1x18x18x4xbf16, #tpu.memory_space<vmem>>, vector<1x16x18x4xbf16>
    %57 = vector.shape_cast %56 : vector<1x16x18x4xbf16> to vector<16x18x4xbf16>
    %58 = arith.extf %57 : vector<16x18x4xbf16> to vector<16x18x4xf32>
    %59 = vector.extract_strided_slice %58 {offsets = [0, 0, 0], sizes = [16, 16, 4], strides = [1, 1, 1]} : vector<16x18x4xf32> to vector<16x16x4xf32>
    %60 = vector.shape_cast %59 : vector<16x16x4xf32> to vector<256x4xf32>
    %c2_36 = arith.constant 2 : index
    %c0_37 = arith.constant 0 : index
    %c0_38 = arith.constant 0 : index
    %c0_39 = arith.constant 0 : index
    %61 = vector.load %arg3[%c2_36, %c0_37, %c0_38, %c0_39] : memref<3x3x4x128xbf16, #tpu.memory_space<vmem>>, vector<1x1x4x128xbf16>
    %62 = vector.shape_cast %61 : vector<1x1x4x128xbf16> to vector<4x128xbf16>
    %63 = arith.extf %62 : vector<4x128xbf16> to vector<4x128xf32>
    %cst_40 = arith.constant dense<0.000000e+00> : vector<256x128xf32>
    %64 = tpu.matmul %60, %63, %cst_40 {dimension_numbers = #tpu.dot_dimension_numbers<[1], [0], [0], [1], [0, 0, 1, 1], [], []>} : vector<256x4xf32>, vector<4x128xf32>, vector<256x128xf32> -> vector<256x128xf32>
    %65 = arith.addf %53, %64 : vector<256x128xf32>
    %66 = vector.extract_strided_slice %58 {offsets = [0, 1, 0], sizes = [16, 16, 4], strides = [1, 1, 1]} : vector<16x18x4xf32> to vector<16x16x4xf32>
    %67 = vector.shape_cast %66 : vector<16x16x4xf32> to vector<256x4xf32>
    %c2_41 = arith.constant 2 : index
    %c1_42 = arith.constant 1 : index
    %c0_43 = arith.constant 0 : index
    %c0_44 = arith.constant 0 : index
    %68 = vector.load %arg3[%c2_41, %c1_42, %c0_43, %c0_44] : memref<3x3x4x128xbf16, #tpu.memory_space<vmem>>, vector<1x1x4x128xbf16>
    %69 = vector.shape_cast %68 : vector<1x1x4x128xbf16> to vector<4x128xbf16>
    %70 = arith.extf %69 : vector<4x128xbf16> to vector<4x128xf32>
    %cst_45 = arith.constant dense<0.000000e+00> : vector<256x128xf32>
    %71 = tpu.matmul %67, %70, %cst_45 {dimension_numbers = #tpu.dot_dimension_numbers<[1], [0], [0], [1], [0, 0, 1, 1], [], []>} : vector<256x4xf32>, vector<4x128xf32>, vector<256x128xf32> -> vector<256x128xf32>
    %72 = arith.addf %65, %71 : vector<256x128xf32>
    %73 = vector.extract_strided_slice %58 {offsets = [0, 2, 0], sizes = [16, 16, 4], strides = [1, 1, 1]} : vector<16x18x4xf32> to vector<16x16x4xf32>
    %74 = vector.shape_cast %73 : vector<16x16x4xf32> to vector<256x4xf32>
    %c2_46 = arith.constant 2 : index
    %c2_47 = arith.constant 2 : index
    %c0_48 = arith.constant 0 : index
    %c0_49 = arith.constant 0 : index
    %75 = vector.load %arg3[%c2_46, %c2_47, %c0_48, %c0_49] : memref<3x3x4x128xbf16, #tpu.memory_space<vmem>>, vector<1x1x4x128xbf16>
    %76 = vector.shape_cast %75 : vector<1x1x4x128xbf16> to vector<4x128xbf16>
    %77 = arith.extf %76 : vector<4x128xbf16> to vector<4x128xf32>
    %cst_50 = arith.constant dense<0.000000e+00> : vector<256x128xf32>
    %78 = tpu.matmul %74, %77, %cst_50 {dimension_numbers = #tpu.dot_dimension_numbers<[1], [0], [0], [1], [0, 0, 1, 1], [], []>} : vector<256x4xf32>, vector<4x128xf32>, vector<256x128xf32> -> vector<256x128xf32>
    %79 = arith.addf %72, %78 : vector<256x128xf32>
    %c0_51 = arith.constant 0 : index
    %c0_52 = arith.constant 0 : index
    %80 = vector.load %arg4[%c0_51, %c0_52] : memref<1x128xf32, #tpu.memory_space<vmem>>, vector<1x128xf32>
    %81 = vector.broadcast %80 : vector<1x128xf32> to vector<256x128xf32>
    %82 = arith.addf %79, %81 : vector<256x128xf32>
    %cst_53 = arith.constant 0.000000e+00 : f32
    %83 = vector.broadcast %cst_53 : f32 to vector<256x128xf32>
    %84 = arith.cmpf ogt, %82, %83 : vector<256x128xf32>
    %cst_54 = arith.constant 1.000000e-01 : f32
    %85 = vector.broadcast %cst_54 : f32 to vector<256x128xf32>
    %86 = arith.mulf %85, %82 : vector<256x128xf32>
    %87 = arith.select %84, %82, %86 : vector<256x128xi1>, vector<256x128xf32>
    %88 = vector.shape_cast %87 : vector<256x128xf32> to vector<16x16x128xf32>
    %c0_55 = arith.constant 0 : index
    %c0_56 = arith.constant 0 : index
    %c0_57 = arith.constant 0 : index
    %c0_58 = arith.constant 0 : index
    %89 = vector.load %arg5[%c0_55, %c0_56, %c0_57, %c0_58] : memref<1x16x16x128xf32, #tpu.memory_space<vmem>>, vector<1x16x16x128xf32>
    %90 = vector.shape_cast %89 : vector<1x16x16x128xf32> to vector<16x16x128xf32>
    %91 = vector.shape_cast %88 : vector<16x16x128xf32> to vector<1x16x16x128xf32>
    tpu.vector_store %arg5[%c0_55, %c0_56, %c0_57, %c0_58], %91 {strides = array<i32>} : memref<1x16x16x128xf32, #tpu.memory_space<vmem>>, vector<1x16x16x128xf32>,
    return
  }
  func.func @transform_0(%arg0: i32, %arg1: i32) -> (i32, i32, i32, i32) {
    %c0_i32 = arith.constant 0 : i32
    %c0_i32_0 = arith.constant 0 : i32
    %c0_i32_1 = arith.constant 0 : i32
    %c0_i32_2 = arith.constant 0 : i32
    return %arg0, %c0_i32, %c0_i32_0, %c0_i32_1 : i32, i32, i32, i32
  }
  func.func @transform_1(%arg0: i32, %arg1: i32) -> (i32, i32, i32, i32) {
    %c0_i32 = arith.constant 0 : i32
    %c0_i32_0 = arith.constant 0 : i32
    %c0_i32_1 = arith.constant 0 : i32
    %c0_i32_2 = arith.constant 0 : i32
    %c0_i32_3 = arith.constant 0 : i32
    return %c0_i32, %c0_i32_0, %c0_i32_1, %c0_i32_2 : i32, i32, i32, i32
  }
  func.func @transform_2(%arg0: i32, %arg1: i32) -> (i32, i32) {
    %c0_i32 = arith.constant 0 : i32
    %c0_i32_0 = arith.constant 0 : i32
    %c0_i32_1 = arith.constant 0 : i32
    return %c0_i32, %c0_i32_0 : i32, i32
  }
  func.func @transform_3(%arg0: i32, %arg1: i32) -> (i32, i32, i32, i32) {
    %c0_i32 = arith.constant 0 : i32
    %c0_i32_0 = arith.constant 0 : i32
    %c0_i32_1 = arith.constant 0 : i32
    return %arg0, %arg1, %c0_i32, %c0_i32_0 : i32, i32, i32, i32
  }
}

</mosaic_0001>

<llo_original>
// kernel: conv_bn_act.1
$region0: #{conv_bn_act.1}
  #allocation0 [shape = 'u32[]', space=smem, size = 0x4, offset = 0x4, fixed_abs, tag = 'smem constant byte address 0x4 - core index']
  #allocation1 [shape = 'u32[72,128]{1,0:T(1,128)}', space=vmem, size = 0x9000, scoped, tag = 'internal scratch']
  %s0 = inlined_call_operand.vmem [shape: bf16[2,18,18,4], index: 0, kind: input, shape index: {}]
  %s1 = inlined_call_operand.vmem [shape: bf16[3,3,4,128], index: 1, kind: input, shape index: {}]
  %s2 = inlined_call_operand.vmem [shape: f32[1,128], index: 2, kind: input, shape index: {}]
  %s3 = inlined_call_operand.vmem [shape: f32[2,16,16,128], index: 3, kind: output, shape index: {}]
  %s4 = sld [smem:[#allocation0]]
  $region45: #{conv_bn_act.1} parent=0
    _
  %s6 = ssub.s32 1, %s4
  %s7 = scalar_select 0, %s6, %s4
  loop: start=0, step=1, limit=4
  $region2: #{conv_bn_act.1} parent=0 // loop_pre_header
    _
  $region3: #{conv_bn_act.1} parent=0 // loop_header
    %s9 = sphi 0, %s13
    %p10 = scmp.ge.s32.totalorder %s9, 4
    %s16 = sphi 0, %s28
    %s17 = sphi 0, %s24
    %s18 = sphi 0, %s16
    %s19 = sphi 0, %s17
    %s20 = sphi 0, %s18
    %s21 = sphi 0, %s19
    %s31 = sphi 0, %s33
    %s34 = sphi 0, %s31
    %s35 = sphi 0, %s34
    %s51 = sphi 0, %s35
    %s55 = sphi 0, %s55
    %s57 = sphi 0, %s55
    %s58 = sphi 0, %s57
    %s72 = sphi 0, %s58
    %s76 = sphi 0, %s76
    %s78 = sphi 0, %s76
    %s79 = sphi 0, %s78
    %s93 = sphi 0, %s79
    %s101 = sphi 0, %s103
    %s104 = sphi 0, %s101
    %s105 = sphi 0, %s104
    %s121 = sphi 0, %s105
  $region4: #{conv_bn_act.1} parent=0 // loop_header_branch
    %12 = sbr.rel (%p10) target = $region8
  $region5: #{conv_bn_act.1} parent=0 // loop_body
    %s14 = ssub.s32 %s9, 1
    %s15 = ssub.s32 %s9, 2
    %s22 = sadd.s32 1, %s17
    %p23 = scmp.ge.s32.totalorder %s22, 1
    %s24 = scalar_select %p23, 0, %s22
    %s25 = sadd.s32 1, %s16
    %s26 = scalar_select %p23, %s25, %s16
    %p27 = scmp.ge.s32.totalorder %s26, 2
    %s28 = scalar_select %p27, 0, %s26
    %s29 = ssub.s32 %s16, %s28
    %p30 = scmp.eq.s32.totalorder %s29, 0
    %s32 = sadd.s32 %s31, 1
    %s33 = scalar_select %p30, %s31, %s32
    %p36 = pneg %p30
    %p37 = scmp.eq.s32.totalorder %s9, 1
    %p38 = por %p36, %p37
    %p39 = scmp.ne.s32.totalorder %s31, %s34
    %p40 = scmp.eq.s32.totalorder %s9, 0
    %p41 = por %p39, %p40
    %p42 = scmp.ne.s32.totalorder %s31, %s34
    %p43 = scmp.eq.s32.totalorder %s14, 1
    %p44 = por %p42, %p43
    %p45 = scmp.ne.s32.totalorder %s34, %s35
    %p46 = scmp.eq.s32.totalorder %s14, 0
    %p47 = por %p45, %p46
    %p48 = scmp.ne.s32.totalorder %s34, %s35
    %p49 = scmp.eq.s32.totalorder %s15, 1
    %p50 = por %p48, %p49
    %p52 = scmp.ne.s32.totalorder %s35, %s51
    %p53 = scmp.eq.s32.totalorder %s15, 0
    %p54 = por %p52, %p53
    %s56 = sadd.s32 %s55, 1
    %p59 = scmp.eq.s32.totalorder %s9, 1
    %p60 = scmp.ne.s32.totalorder %s55, %s57
    %p61 = scmp.eq.s32.totalorder %s9, 0
    %p62 = por %p60, %p61
    %p63 = scmp.ne.s32.totalorder %s55, %s57
    %p64 = scmp.eq.s32.totalorder %s14, 1
    %p65 = por %p63, %p64
    %p66 = scmp.ne.s32.totalorder %s57, %s58
    %p67 = scmp.eq.s32.totalorder %s14, 0
    %p68 = por %p66, %p67
    %p69 = scmp.ne.s32.totalorder %s57, %s58
    %p70 = scmp.eq.s32.totalorder %s15, 1
    %p71 = por %p69, %p70
    %p73 = scmp.ne.s32.totalorder %s58, %s72
    %p74 = scmp.eq.s32.totalorder %s15, 0
    %p75 = por %p73, %p74
    %s77 = sadd.s32 %s76, 1
    %p80 = scmp.eq.s32.totalorder %s9, 1
    %p81 = scmp.ne.s32.totalorder %s76, %s78
    %p82 = scmp.eq.s32.totalorder %s9, 0
    %p83 = por %p81, %p82
    %p84 = scmp.ne.s32.totalorder %s76, %s78
    %p85 = scmp.eq.s32.totalorder %s14, 1
    %p86 = por %p84, %p85
    %p87 = scmp.ne.s32.totalorder %s78, %s79
    %p88 = scmp.eq.s32.totalorder %s14, 0
    %p89 = por %p87, %p88
    %p90 = scmp.ne.s32.totalorder %s78, %s79
    %p91 = scmp.eq.s32.totalorder %s15, 1
    %p92 = por %p90, %p91
    %p94 = scmp.ne.s32.totalorder %s79, %s93
    %p95 = scmp.eq.s32.totalorder %s15, 0
    %p96 = por %p94, %p95
    %s97 = ssub.s32 %s16, %s28
    %s98 = ssub.s32 %s17, %s24
    %s99 = sor.u32 %s97, %s98
    %p100 = scmp.eq.s32.totalorder %s99, 0
    %s102 = sadd.s32 %s101, 1
    %s103 = scalar_select %p100, %s101, %s102
    %p106 = pneg %p100
    %p107 = scmp.eq.s32.totalorder %s9, 1
    %p108 = por %p106, %p107
    %p109 = scmp.ne.s32.totalorder %s101, %s104
    %p110 = scmp.eq.s32.totalorder %s9, 0
    %p111 = por %p109, %p110
    %p112 = scmp.ne.s32.totalorder %s101, %s104
    %p113 = scmp.eq.s32.totalorder %s14, 1
    %p114 = por %p112, %p113
    %p115 = scmp.ne.s32.totalorder %s104, %s105
    %p116 = scmp.eq.s32.totalorder %s14, 0
    %p117 = por %p115, %p116
    %p118 = scmp.ne.s32.totalorder %s104, %s105
    %p119 = scmp.eq.s32.totalorder %s15, 1
    %p120 = por %p118, %p119
    %p122 = scmp.ne.s32.totalorder %s105, %s121
    %p123 = scmp.eq.s32.totalorder %s15, 0
    %p124 = por %p122, %p123
    %p125 = scmp.le.s32.totalorder 1, %s9
    %p126 = scmp.lt.s32.totalorder %s9, 3
    %p127 = pnand %p125, %p126
    %p128 = pneg %p127
    // Predicated region
    $region9: #{conv_bn_act.1} parent=5 // pred_check
      _
    $region10: #{conv_bn_act.1} parent=5 // pred_check_branch
      %130 = sbr.rel (%p127) target = $region12
    $region11: #{conv_bn_act.1} parent=5 // pred_region
      %s131 = ssub.s32 %s9, 1
      // Predicated region
      $region13: #{conv_bn_act.1} parent=11 // pred_check
        %p132 = pneg %p68
      $region14: #{conv_bn_act.1} parent=11 // pred_check_branch
        %134 = sbr.rel (%p132) target = $region16
      $region15: #{conv_bn_act.1} parent=11 // pred_region
        _
      $region16: #{conv_bn_act.1} parent=11 // pred_fallthru
        _
      // Predicated region
      $region17: #{conv_bn_act.1} parent=11 // pred_check
        %p135 = pneg %p89
      $region18: #{conv_bn_act.1} parent=11 // pred_check_branch
        %137 = sbr.rel (%p135) target = $region20
      $region19: #{conv_bn_act.1} parent=11 // pred_region
        _
      $region20: #{conv_bn_act.1} parent=11 // pred_fallthru
        _
    $region12: #{conv_bn_act.1} parent=5 // pred_fallthru
      _
    %p138 = scmp.lt.s32.totalorder %s9, 2
    // Predicated region
    $region21: #{conv_bn_act.1} parent=5 // pred_check
      %p139 = pneg %p138
    $region22: #{conv_bn_act.1} parent=5 // pred_check_branch
      %141 = sbr.rel (%p139) target = $region24
    $region23: #{conv_bn_act.1} parent=5 // pred_region
      // Predicated region
      $region25: #{conv_bn_act.1} parent=23 // pred_check
        %p142 = pneg %p41
      $region26: #{conv_bn_act.1} parent=23 // pred_check_branch
        %144 = sbr.rel (%p142) target = $region28
      $region27: #{conv_bn_act.1} parent=23 // pred_region
        %p145 = scmp.lt.s32.totalorder %s16, 1
        %s146 = scalar_select %p145, %s16, 1
        %s147 = smul.addr %s146, 54
        %s148 = smul.addr %s147, 4
        %s149 = scalar_lea.vmem %s0, %s148
      $region28: #{conv_bn_act.1} parent=23 // pred_fallthru
        _
    $region24: #{conv_bn_act.1} parent=5 // pred_fallthru
      _
    %p150 = scmp.le.s32.totalorder 1, %s9
    %p151 = scmp.lt.s32.totalorder %s9, 3
    %p152 = pnand %p150, %p151
    %p153 = pneg %p152
    // Predicated region
    $region29: #{conv_bn_act.1} parent=5 // pred_check
      _
    $region30: #{conv_bn_act.1} parent=5 // pred_check_branch
      %155 = sbr.rel (%p152) target = $region32
    $region31: #{conv_bn_act.1} parent=5 // pred_region
      %s156 = ssub.s32 %s9, 1
      %p157 = scmp.lt.s32.totalorder %s18, 1
      %s158 = scalar_select %p157, %s18, 1
      %s159 = smul.addr %s158, 54
      %s160 = smul.addr %s159, 4
      %s161 = scalar_lea.vmem %s0, %s160
      %p162 = pneg %p47
      %p163 = pneg %p44
      %p164 = pneg %p68
      %p165 = pneg %p65
      %p166 = pneg %p89
      %p167 = pneg %p86
      %p168 = pneg %p117
      %p169 = pneg %p114
      %s170 = smul.u32 16, %s19
      %p171 = scmp.lt.s32.totalorder %s18, 1
      %s172 = scalar_select %p171, %s18, 1
      %p173 = scmp.lt.s32.totalorder %s170, 15
      %s174 = scalar_select %p173, %s170, 15
      %s175 = smul.addr %s174, 2
      %s176 = smul.addr %s172, 32
      %s177 = sadd.s32 %s175, %s176
      %s178 = smul.addr %s177, 8
      %s179 = scalar_lea.vmem %s3, %s178
      %p180 = scmp.lt.s32.totalorder %s18, 1
      %s181 = scalar_select %p180, %s18, 1
      %s182 = smul.addr %s181, 54
      %s183 = smul.addr %s182, 4
      %s184 = scalar_lea.vmem %s0, %s183
      %s185 = smul.u32 16, %s19
      %p186 = scmp.lt.s32.totalorder %s18, 1
      %s187 = scalar_select %p186, %s18, 1
      %p188 = scmp.lt.s32.totalorder %s185, 15
      %s189 = scalar_select %p188, %s185, 15
      %s190 = smul.addr %s189, 2
      %s191 = smul.addr %s187, 32
      %s192 = sadd.s32 %s190, %s191
      %s193 = smul.addr %s192, 8
      %s194 = scalar_lea.vmem %s3, %s193
      %s195 = smul.u32 16, %s19
      %s196 = smul.u32 %s19, 16
      %s197 = smul.u32 %s196, 3
      %s198 = smul.addr %s197, 4
      %s199 = scalar_lea.vmem %s184, %s198
      %v200 = vld [vmem:[%s199] sm:$0xf]
      %v201 = vld [vmem:[%s199 + $0x4] sm:$0xf]
      %v202 = vld [vmem:[%s199 + $0x8] sm:$0x1]
      %v203 = vld [vmem:[%s199 + $0xc] sm:$0xf]
      %v204 = vld [vmem:[%s199 + $0x10] sm:$0xf]
      %v205 = vld [vmem:[%s199 + $0x14] sm:$0x1]
      %v206 = vld [vmem:[%s199 + $0x18] sm:$0xf]
      %v207 = vld [vmem:[%s199 + $0x1c] sm:$0xf]
      %v208 = vld [vmem:[%s199 + $0x20] sm:$0x1]
      %v209 = vld [vmem:[%s199 + $0x24] sm:$0xf]
      %v210 = vld [vmem:[%s199 + $0x28] sm:$0xf]
      %v211 = vld [vmem:[%s199 + $0x2c] sm:$0x1]
      %v212 = vld [vmem:[%s199 + $0x30] sm:$0xf]
      %v213 = vld [vmem:[%s199 + $0x34] sm:$0xf]
      %v214 = vld [vmem:[%s199 + $0x38] sm:$0x1]
      %v215 = vld [vmem:[%s199 + $0x3c] sm:$0xf]
      %v216 = vld [vmem:[%s199 + $0x40] sm:$0xf]
      %v217 = vld [vmem:[%s199 + $0x44] sm:$0x1]
      %v218 = vld [vmem:[%s199 + $0x48] sm:$0xf]
      %v219 = vld [vmem:[%s199 + $0x4c] sm:$0xf]
      %v220 = vld [vmem:[%s199 + $0x50] sm:$0x1]
      %v221 = vld [vmem:[%s199 + $0x54] sm:$0xf]
      %v222 = vld [vmem:[%s199 + $0x58] sm:$0xf]
      %v223 = vld [vmem:[%s199 + $0x5c] sm:$0x1]
      %v224 = vld [vmem:[%s199 + $0x60] sm:$0xf]
      %v225 = vld [vmem:[%s199 + $0x64] sm:$0xf]
      %v226 = vld [vmem:[%s199 + $0x68] sm:$0x1]
      %v227 = vld [vmem:[%s199 + $0x6c] sm:$0xf]
      %v228 = vld [vmem:[%s199 + $0x70] sm:$0xf]
      %v229 = vld [vmem:[%s199 + $0x74] sm:$0x1]
      %v230 = vld [vmem:[%s199 + $0x78] sm:$0xf]
      %v231 = vld [vmem:[%s199 + $0x7c] sm:$0xf]
      %v232 = vld [vmem:[%s199 + $0x80] sm:$0x1]
      %v233 = vld [vmem:[%s199 + $0x84] sm:$0xf]
      %v234 = vld [vmem:[%s199 + $0x88] sm:$0xf]
      %v235 = vld [vmem:[%s199 + $0x8c] sm:$0x1]
      %v236 = vld [vmem:[%s199 + $0x90] sm:$0xf]
      %v237 = vld [vmem:[%s199 + $0x94] sm:$0xf]
      %v238 = vld [vmem:[%s199 + $0x98] sm:$0x1]
      %v239 = vld [vmem:[%s199 + $0x9c] sm:$0xf]
      %v240 = vld [vmem:[%s199 + $0xa0] sm:$0xf]
      %v241 = vld [vmem:[%s199 + $0xa4] sm:$0x1]
      %v242 = vld [vmem:[%s199 + $0xa8] sm:$0xf]
      %v243 = vld [vmem:[%s199 + $0xac] sm:$0xf]
      %v244 = vld [vmem:[%s199 + $0xb0] sm:$0x1]
      %v245 = vld [vmem:[%s199 + $0xb4] sm:$0xf]
      %v246 = vld [vmem:[%s199 + $0xb8] sm:$0xf]
      %v247 = vld [vmem:[%s199 + $0xbc] sm:$0x1]
      %v248 = vunpack.c.l.bf16 %v200
      %v249 = vunpack.c.l.bf16 %v201
      %v250 = vunpack.c.l.bf16 %v202
      %v251 = vunpack.c.l.bf16 %v203
      %v252 = vunpack.c.l.bf16 %v204
      %v253 = vunpack.c.l.bf16 %v205
      %v254 = vunpack.c.l.bf16 %v206
      %v255 = vunpack.c.l.bf16 %v207
      %v256 = vunpack.c.l.bf16 %v208
      %v257 = vunpack.c.l.bf16 %v209
      %v258 = vunpack.c.l.bf16 %v210
      %v259 = vunpack.c.l.bf16 %v211
      %v260 = vunpack.c.l.bf16 %v212
      %v261 = vunpack.c.l.bf16 %v213
      %v262 = vunpack.c.l.bf16 %v214
      %v263 = vunpack.c.l.bf16 %v215
      %v264 = vunpack.c.l.bf16 %v216
      %v265 = vunpack.c.l.bf16 %v217
      %v266 = vunpack.c.l.bf16 %v218
      %v267 = vunpack.c.l.bf16 %v219
      %v268 = vunpack.c.l.bf16 %v220
      %v269 = vunpack.c.l.bf16 %v221
      %v270 = vunpack.c.l.bf16 %v222
      %v271 = vunpack.c.l.bf16 %v223
      %v272 = vunpack.c.l.bf16 %v224
      %v273 = vunpack.c.l.bf16 %v225
      %v274 = vunpack.c.l.bf16 %v226
      %v275 = vunpack.c.l.bf16 %v227
      %v276 = vunpack.c.l.bf16 %v228
      %v277 = vunpack.c.l.bf16 %v229
      %v278 = vunpack.c.l.bf16 %v230
      %v279 = vunpack.c.l.bf16 %v231
      %v280 = vunpack.c.l.bf16 %v232
      %v281 = vunpack.c.l.bf16 %v233
      %v282 = vunpack.c.l.bf16 %v234
      %v283 = vunpack.c.l.bf16 %v235
      %v284 = vunpack.c.l.bf16 %v236
      %v285 = vunpack.c.l.bf16 %v237
      %v286 = vunpack.c.l.bf16 %v238
      %v287 = vunpack.c.l.bf16 %v239
      %v288 = vunpack.c.l.bf16 %v240
      %v289 = vunpack.c.l.bf16 %v241
      %v290 = vunpack.c.l.bf16 %v242
      %v291 = vunpack.c.l.bf16 %v243
      %v292 = vunpack.c.l.bf16 %v244
      %v293 = vunpack.c.l.bf16 %v245
      %v294 = vunpack.c.l.bf16 %v246
      %v295 = vunpack.c.l.bf16 %v247
      %v296 = vld [vmem:[%s1] sm:$0x3]
      %v297 = vunpack.c.l.bf16 %v296
      %vm346 = vcmask 1046528
      %v347 = vrot.slane %v248, 1
      %v348 = vrot.slane %v249, 1
      %v349 = vsel %vm346, %v347, %v348
      %v350 = vrot.slane %v250, 1
      %v351 = vsel %vm346, %v348, %v350
      %v352 = vrot.slane %v251, 1
      %v353 = vrot.slane %v252, 1
      %v354 = vsel %vm346, %v352, %v353
      %v355 = vrot.slane %v253, 1
      %v356 = vsel %vm346, %v353, %v355
      %v357 = vrot.slane %v254, 1
      %v358 = vrot.slane %v255, 1
      %v359 = vsel %vm346, %v357, %v358
      %v360 = vrot.slane %v256, 1
      %v361 = vsel %vm346, %v358, %v360
      %v362 = vrot.slane %v257, 1
      %v363 = vrot.slane %v258, 1
      %v364 = vsel %vm346, %v362, %v363
      %v365 = vrot.slane %v259, 1
      %v366 = vsel %vm346, %v363, %v365
      %v367 = vrot.slane %v260, 1
      %v368 = vrot.slane %v261, 1
      %v369 = vsel %vm346, %v367, %v368
      %v370 = vrot.slane %v262, 1
      %v371 = vsel %vm346, %v368, %v370
      %v372 = vrot.slane %v263, 1
      %v373 = vrot.slane %v264, 1
      %v374 = vsel %vm346, %v372, %v373
      %v375 = vrot.slane %v265, 1
      %v376 = vsel %vm346, %v373, %v375
      %v377 = vrot.slane %v266, 1
      %v378 = vrot.slane %v267, 1
      %v379 = vsel %vm346, %v377, %v378
      %v380 = vrot.slane %v268, 1
      %v381 = vsel %vm346, %v378, %v380
      %v382 = vrot.slane %v269, 1
      %v383 = vrot.slane %v270, 1
      %v384 = vsel %vm346, %v382, %v383
      %v385 = vrot.slane %v271, 1
      %v386 = vsel %vm346, %v383, %v385
      %v387 = vrot.slane %v272, 1
      %v388 = vrot.slane %v273, 1
      %v389 = vsel %vm346, %v387, %v388
      %v390 = vrot.slane %v274, 1
      %v391 = vsel %vm346, %v388, %v390
      %v392 = vrot.slane %v275, 1
      %v393 = vrot.slane %v276, 1
      %v394 = vsel %vm346, %v392, %v393
      %v395 = vrot.slane %v277, 1
      %v396 = vsel %vm346, %v393, %v395
      %v397 = vrot.slane %v278, 1
      %v398 = vrot.slane %v279, 1
      %v399 = vsel %vm346, %v397, %v398
      %v400 = vrot.slane %v280, 1
      %v401 = vsel %vm346, %v398, %v400
      %v402 = vrot.slane %v281, 1
      %v403 = vrot.slane %v282, 1
      %v404 = vsel %vm346, %v402, %v403
      %v405 = vrot.slane %v283, 1
      %v406 = vsel %vm346, %v403, %v405
      %v407 = vrot.slane %v284, 1
      %v408 = vrot.slane %v285, 1
      %v409 = vsel %vm346, %v407, %v408
      %v410 = vrot.slane %v286, 1
      %v411 = vsel %vm346, %v408, %v410
      %v412 = vrot.slane %v287, 1
      %v413 = vrot.slane %v288, 1
      %v414 = vsel %vm346, %v412, %v413
      %v415 = vrot.slane %v289, 1
      %v416 = vsel %vm346, %v413, %v415
      %v417 = vrot.slane %v290, 1
      %v418 = vrot.slane %v291, 1
      %v419 = vsel %vm346, %v417, %v418
      %v420 = vrot.slane %v292, 1
      %v421 = vsel %vm346, %v418, %v420
      %v422 = vrot.slane %v293, 1
      %v423 = vrot.slane %v294, 1
      %v424 = vsel %vm346, %v422, %v423
      %v425 = vrot.slane %v295, 1
      %v426 = vsel %vm346, %v423, %v425
      %s427 = scalar_lea.vmem %s1, 2
      %v428 = vld [vmem:[%s427] sm:$0x3]
      %v429 = vunpack.c.l.bf16 %v428
      %vm430 = vcmask 31744
      %v431 = vsel %vm430, %v349, 0
      %v433 = vsel %vm430, %v351, 0
      %v435 = vsel %vm430, %v354, 0
      %v437 = vsel %vm430, %v356, 0
      %v439 = vsel %vm430, %v359, 0
      %v441 = vsel %vm430, %v361, 0
      %v443 = vsel %vm430, %v364, 0
      %v445 = vsel %vm430, %v366, 0
      %v447 = vsel %vm430, %v369, 0
      %v449 = vsel %vm430, %v371, 0
      %v451 = vsel %vm430, %v374, 0
      %v453 = vsel %vm430, %v376, 0
      %v455 = vsel %vm430, %v379, 0
      %v457 = vsel %vm430, %v381, 0
      %v459 = vsel %vm430, %v384, 0
      %v461 = vsel %vm430, %v386, 0
      %v463 = vsel %vm430, %v389, 0
      %v465 = vsel %vm430, %v391, 0
      %v467 = vsel %vm430, %v394, 0
      %v469 = vsel %vm430, %v396, 0
      %v471 = vsel %vm430, %v399, 0
      %v473 = vsel %vm430, %v401, 0
      %v475 = vsel %vm430, %v404, 0
      %v477 = vsel %vm430, %v406, 0
      %v479 = vsel %vm430, %v409, 0
      %v481 = vsel %vm430, %v411, 0
      %v483 = vsel %vm430, %v414, 0
      %v485 = vsel %vm430, %v416, 0
      %v487 = vsel %vm430, %v419, 0
      %v489 = vsel %vm430, %v421, 0
      %v491 = vsel %vm430, %v424, 0
      %v493 = vsel %vm430, %v426, 0
      %vm495 = vcmask 1043456
      %v497 = vsel %vm495, %v429, 0
      %499 = vmatpush.msra.mxu0 0.0
      %500 = vmatpush.msra.mxu0 0.0
      %501 = vmatpush.msra.mxu0 0.0
      %502 = vmatpush.msra.mxu0 0.0
      %503 = vmatpush.msra.mxu0 0.0
      %504 = vmatpush.msra.mxu0 0.0
      %505 = vmatpush.msra.mxu0 0.0
      %506 = vmatpush.msra.mxu0 0.0
      %507 = vmatpush.msra.mxu0 0.0
      %508 = vmatpush.msra.mxu0 0.0
      %509 = vmatpush.msra.mxu0 0.0
      %510 = vmatpush.msra.mxu0 0.0
      %511 = vmatpush.msra.mxu0 0.0
      %512 = vmatpush.msra.mxu0 0.0
      %513 = vmatpush.msra.mxu0 0.0
      %514 = vmatpush.msra.mxu0 %v497
      %515 = vmatmul.f32.gmra.mxu0 %v431
      %v516 = vpop.f32.mrf.mxu0
      %v517 = vadd.f32 0.0, %v516
      %518 = vmatmul.f32.gmra.mxu0 %v433
      %v519 = vpop.f32.mrf.mxu0
      %v520 = vadd.f32 0.0, %v519
      %521 = vmatmul.f32.gmra.mxu0 %v435
      %v522 = vpop.f32.mrf.mxu0
      %v523 = vadd.f32 0.0, %v522
      %524 = vmatmul.f32.gmra.mxu0 %v437
      %v525 = vpop.f32.mrf.mxu0
      %v526 = vadd.f32 0.0, %v525
      %527 = vmatmul.f32.gmra.mxu0 %v439
      %v528 = vpop.f32.mrf.mxu0
      %v529 = vadd.f32 0.0, %v528
      %530 = vmatmul.f32.gmra.mxu0 %v441
      %v531 = vpop.f32.mrf.mxu0
      %v532 = vadd.f32 0.0, %v531
      %533 = vmatmul.f32.gmra.mxu0 %v443
      %v534 = vpop.f32.mrf.mxu0
      %v535 = vadd.f32 0.0, %v534
      %536 = vmatmul.f32.gmra.mxu0 %v445
      %v537 = vpop.f32.mrf.mxu0
      %v538 = vadd.f32 0.0, %v537
      %539 = vmatmul.f32.gmra.mxu0 %v447
      %v540 = vpop.f32.mrf.mxu0
      %v541 = vadd.f32 0.0, %v540
      %542 = vmatmul.f32.gmra.mxu0 %v449
      %v543 = vpop.f32.mrf.mxu0
      %v544 = vadd.f32 0.0, %v543
      %545 = vmatmul.f32.gmra.mxu0 %v451
      %v546 = vpop.f32.mrf.mxu0
      %v547 = vadd.f32 0.0, %v546
      %548 = vmatmul.f32.gmra.mxu0 %v453
      %v549 = vpop.f32.mrf.mxu0
      %v550 = vadd.f32 0.0, %v549
      %551 = vmatmul.f32.gmra.mxu0 %v455
      %v552 = vpop.f32.mrf.mxu0
      %v553 = vadd.f32 0.0, %v552
      %554 = vmatmul.f32.gmra.mxu0 %v457
      %v555 = vpop.f32.mrf.mxu0
      %v556 = vadd.f32 0.0, %v555
      %557 = vmatmul.f32.gmra.mxu0 %v459
      %v558 = vpop.f32.mrf.mxu0
      %v559 = vadd.f32 0.0, %v558
      %560 = vmatmul.f32.gmra.mxu0 %v461
      %v561 = vpop.f32.mrf.mxu0
      %v562 = vadd.f32 0.0, %v561
      %563 = vmatmul.f32.gmra.mxu0 %v463
      %v564 = vpop.f32.mrf.mxu0
      %v565 = vadd.f32 0.0, %v564
      %566 = vmatmul.f32.gmra.mxu0 %v465
      %v567 = vpop.f32.mrf.mxu0
      %v568 = vadd.f32 0.0, %v567
      %569 = vmatmul.f32.gmra.mxu0 %v467
      %v570 = vpop.f32.mrf.mxu0
      %v571 = vadd.f32 0.0, %v570
      %572 = vmatmul.f32.gmra.mxu0 %v469
      %v573 = vpop.f32.mrf.mxu0
      %v574 = vadd.f32 0.0, %v573
      %575 = vmatmul.f32.gmra.mxu0 %v471
      %v576 = vpop.f32.mrf.mxu0
      %v577 = vadd.f32 0.0, %v576
      %578 = vmatmul.f32.gmra.mxu0 %v473
      %v579 = vpop.f32.mrf.mxu0
      %v580 = vadd.f32 0.0, %v579
      %581 = vmatmul.f32.gmra.mxu0 %v475
      %v582 = vpop.f32.mrf.mxu0
      %v583 = vadd.f32 0.0, %v582
      %584 = vmatmul.f32.gmra.mxu0 %v477
      %v585 = vpop.f32.mrf.mxu0
      %v586 = vadd.f32 0.0, %v585
      %587 = vmatmul.f32.gmra.mxu0 %v479
      %v588 = vpop.f32.mrf.mxu0
      %v589 = vadd.f32 0.0, %v588
      %590 = vmatmul.f32.gmra.mxu0 %v481
      %v591 = vpop.f32.mrf.mxu0
      %v592 = vadd.f32 0.0, %v591
      %593 = vmatmul.f32.gmra.mxu0 %v483
      %v594 = vpop.f32.mrf.mxu0
      %v595 = vadd.f32 0.0, %v594
      %596 = vmatmul.f32.gmra.mxu0 %v485
      %v597 = vpop.f32.mrf.mxu0
      %v598 = vadd.f32 0.0, %v597
      %599 = vmatmul.f32.gmra.mxu0 %v487
      %v600 = vpop.f32.mrf.mxu0
      %v601 = vadd.f32 0.0, %v600
      %602 = vmatmul.f32.gmra.mxu0 %v489
      %v603 = vpop.f32.mrf.mxu0
      %v604 = vadd.f32 0.0, %v603
      %605 = vmatmul.f32.gmra.mxu0 %v491
      %v606 = vpop.f32.mrf.mxu0
      %v607 = vadd.f32 0.0, %v606
      %608 = vmatmul.f32.gmra.mxu0 %v493
      %v609 = vpop.f32.mrf.mxu0
      %v610 = vadd.f32 0.0, %v609
      %611 = vdwg.mxu0
      %v612 = vsel %vm430, %v248, 0
      %v614 = vsel %vm430, %v249, 0
      %v616 = vsel %vm430, %v251, 0
      %v618 = vsel %vm430, %v252, 0
      %v620 = vsel %vm430, %v254, 0
      %v622 = vsel %vm430, %v255, 0
      %v624 = vsel %vm430, %v257, 0
      %v626 = vsel %vm430, %v258, 0
      %v628 = vsel %vm430, %v260, 0
      %v630 = vsel %vm430, %v261, 0
      %v632 = vsel %vm430, %v263, 0
      %v634 = vsel %vm430, %v264, 0
      %v636 = vsel %vm430, %v266, 0
      %v638 = vsel %vm430, %v267, 0
      %v640 = vsel %vm430, %v269, 0
      %v642 = vsel %vm430, %v270, 0
      %v644 = vsel %vm430, %v272, 0
      %v646 = vsel %vm430, %v273, 0
      %v648 = vsel %vm430, %v275, 0
      %v650 = vsel %vm430, %v276, 0
      %v652 = vsel %vm430, %v278, 0
      %v654 = vsel %vm430, %v279, 0
      %v656 = vsel %vm430, %v281, 0
      %v658 = vsel %vm430, %v282, 0
      %v660 = vsel %vm430, %v284, 0
      %v662 = vsel %vm430, %v285, 0
      %v664 = vsel %vm430, %v287, 0
      %v666 = vsel %vm430, %v288, 0
      %v668 = vsel %vm430, %v290, 0
      %v670 = vsel %vm430, %v291, 0
      %v672 = vsel %vm430, %v293, 0
      %v674 = vsel %vm430, %v294, 0
      %v677 = vsel %vm495, %v297, 0
      %679 = vmatpush.msra.mxu0 0.0
      %680 = vmatpush.msra.mxu0 0.0
      %681 = vmatpush.msra.mxu0 0.0
      %682 = vmatpush.msra.mxu0 0.0
      %683 = vmatpush.msra.mxu0 0.0
      %684 = vmatpush.msra.mxu0 0.0
      %685 = vmatpush.msra.mxu0 0.0
      %686 = vmatpush.msra.mxu0 0.0
      %687 = vmatpush.msra.mxu0 0.0
      %688 = vmatpush.msra.mxu0 0.0
      %689 = vmatpush.msra.mxu0 0.0
      %690 = vmatpush.msra.mxu0 0.0
      %691 = vmatpush.msra.mxu0 0.0
      %692 = vmatpush.msra.mxu0 0.0
      %693 = vmatpush.msra.mxu0 0.0
      %694 = vmatpush.msra.mxu0 %v677
      %695 = vmatmul.f32.gmra.mxu0 %v612
      %v696 = vpop.f32.mrf.mxu0
      %v697 = vadd.f32 %v517, %v696
      %698 = vmatmul.f32.gmra.mxu0 %v614
      %v699 = vpop.f32.mrf.mxu0
      %v700 = vadd.f32 %v520, %v699
      %701 = vmatmul.f32.gmra.mxu0 %v616
      %v702 = vpop.f32.mrf.mxu0
      %v703 = vadd.f32 %v523, %v702
      %704 = vmatmul.f32.gmra.mxu0 %v618
      %v705 = vpop.f32.mrf.mxu0
      %v706 = vadd.f32 %v526, %v705
      %707 = vmatmul.f32.gmra.mxu0 %v620
      %v708 = vpop.f32.mrf.mxu0
      %v709 = vadd.f32 %v529, %v708
      %710 = vmatmul.f32.gmra.mxu0 %v622
      %v711 = vpop.f32.mrf.mxu0
      %v712 = vadd.f32 %v532, %v711
      %713 = vmatmul.f32.gmra.mxu0 %v624
      %v714 = vpop.f32.mrf.mxu0
      %v715 = vadd.f32 %v535, %v714
      %716 = vmatmul.f32.gmra.mxu0 %v626
      %v717 = vpop.f32.mrf.mxu0
      %v718 = vadd.f32 %v538, %v717
      %719 = vmatmul.f32.gmra.mxu0 %v628
      %v720 = vpop.f32.mrf.mxu0
      %v721 = vadd.f32 %v541, %v720
      %722 = vmatmul.f32.gmra.mxu0 %v630
      %v723 = vpop.f32.mrf.mxu0
      %v724 = vadd.f32 %v544, %v723
      %725 = vmatmul.f32.gmra.mxu0 %v632
      %v726 = vpop.f32.mrf.mxu0
      %v727 = vadd.f32 %v547, %v726
      %728 = vmatmul.f32.gmra.mxu0 %v634
      %v729 = vpop.f32.mrf.mxu0
      %v730 = vadd.f32 %v550, %v729
      %731 = vmatmul.f32.gmra.mxu0 %v636
      %v732 = vpop.f32.mrf.mxu0
      %v733 = vadd.f32 %v553, %v732
      %734 = vmatmul.f32.gmra.mxu0 %v638
      %v735 = vpop.f32.mrf.mxu0
      %v736 = vadd.f32 %v556, %v735
      %737 = vmatmul.f32.gmra.mxu0 %v640
      %v738 = vpop.f32.mrf.mxu0
      %v739 = vadd.f32 %v559, %v738
      %740 = vmatmul.f32.gmra.mxu0 %v642
      %v741 = vpop.f32.mrf.mxu0
      %v742 = vadd.f32 %v562, %v741
      %743 = vmatmul.f32.gmra.mxu0 %v644
      %v744 = vpop.f32.mrf.mxu0
      %v745 = vadd.f32 %v565, %v744
      %746 = vmatmul.f32.gmra.mxu0 %v646
      %v747 = vpop.f32.mrf.mxu0
      %v748 = vadd.f32 %v568, %v747
      %749 = vmatmul.f32.gmra.mxu0 %v648
      %v750 = vpop.f32.mrf.mxu0
      %v751 = vadd.f32 %v571, %v750
      %752 = vmatmul.f32.gmra.mxu0 %v650
      %v753 = vpop.f32.mrf.mxu0
      %v754 = vadd.f32 %v574, %v753
      %755 = vmatmul.f32.gmra.mxu0 %v652
      %v756 = vpop.f32.mrf.mxu0
      %v757 = vadd.f32 %v577, %v756
      %758 = vmatmul.f32.gmra.mxu0 %v654
      %v759 = vpop.f32.mrf.mxu0
      %v760 = vadd.f32 %v580, %v759
      %761 = vmatmul.f32.gmra.mxu0 %v656
      %v762 = vpop.f32.mrf.mxu0
      %v763 = vadd.f32 %v583, %v762
      %764 = vmatmul.f32.gmra.mxu0 %v658
      %v765 = vpop.f32.mrf.mxu0
      %v766 = vadd.f32 %v586, %v765
      %767 = vmatmul.f32.gmra.mxu0 %v660
      %v768 = vpop.f32.mrf.mxu0
      %v769 = vadd.f32 %v589, %v768
      %770 = vmatmul.f32.gmra.mxu0 %v662
      %v771 = vpop.f32.mrf.mxu0
      %v772 = vadd.f32 %v592, %v771
      %773 = vmatmul.f32.gmra.mxu0 %v664
      %v774 = vpop.f32.mrf.mxu0
      %v775 = vadd.f32 %v595, %v774
      %776 = vmatmul.f32.gmra.mxu0 %v666
      %v777 = vpop.f32.mrf.mxu0
      %v778 = vadd.f32 %v598, %v777
      %779 = vmatmul.f32.gmra.mxu0 %v668
      %v780 = vpop.f32.mrf.mxu0
      %v781 = vadd.f32 %v601, %v780
      %782 = vmatmul.f32.gmra.mxu0 %v670
      %v783 = vpop.f32.mrf.mxu0
      %v784 = vadd.f32 %v604, %v783
      %785 = vmatmul.f32.gmra.mxu0 %v672
      %v786 = vpop.f32.mrf.mxu0
      %v787 = vadd.f32 %v607, %v786
      %788 = vmatmul.f32.gmra.mxu0 %v674
      %v789 = vpop.f32.mrf.mxu0
      %v790 = vadd.f32 %v610, %v789
      %791 = vdwg.mxu0
      %vm792 = vcmask 1045504
      %v793 = vrot.slane %v248, 2
      %v794 = vrot.slane %v249, 2
      %v795 = vsel %vm792, %v793, %v794
      %v796 = vrot.slane %v250, 2
      %v797 = vsel %vm792, %v794, %v796
      %v798 = vrot.slane %v251, 2
      %v799 = vrot.slane %v252, 2
      %v800 = vsel %vm792, %v798, %v799
      %v801 = vrot.slane %v253, 2
      %v802 = vsel %vm792, %v799, %v801
      %v803 = vrot.slane %v254, 2
      %v804 = vrot.slane %v255, 2
      %v805 = vsel %vm792, %v803, %v804
      %v806 = vrot.slane %v256, 2
      %v807 = vsel %vm792, %v804, %v806
      %v808 = vrot.slane %v257, 2
      %v809 = vrot.slane %v258, 2
      %v810 = vsel %vm792, %v808, %v809
      %v811 = vrot.slane %v259, 2
      %v812 = vsel %vm792, %v809, %v811
      %v813 = vrot.slane %v260, 2
      %v814 = vrot.slane %v261, 2
      %v815 = vsel %vm792, %v813, %v814
      %v816 = vrot.slane %v262, 2
      %v817 = vsel %vm792, %v814, %v816
      %v818 = vrot.slane %v263, 2
      %v819 = vrot.slane %v264, 2
      %v820 = vsel %vm792, %v818, %v819
      %v821 = vrot.slane %v265, 2
      %v822 = vsel %vm792, %v819, %v821
      %v823 = vrot.slane %v266, 2
      %v824 = vrot.slane %v267, 2
      %v825 = vsel %vm792, %v823, %v824
      %v826 = vrot.slane %v268, 2
      %v827 = vsel %vm792, %v824, %v826
      %v828 = vrot.slane %v269, 2
      %v829 = vrot.slane %v270, 2
      %v830 = vsel %vm792, %v828, %v829
      %v831 = vrot.slane %v271, 2
      %v832 = vsel %vm792, %v829, %v831
      %v833 = vrot.slane %v272, 2
      %v834 = vrot.slane %v273, 2
      %v835 = vsel %vm792, %v833, %v834
      %v836 = vrot.slane %v274, 2
      %v837 = vsel %vm792, %v834, %v836
      %v838 = vrot.slane %v275, 2
      %v839 = vrot.slane %v276, 2
      %v840 = vsel %vm792, %v838, %v839
      %v841 = vrot.slane %v277, 2
      %v842 = vsel %vm792, %v839, %v841
      %v843 = vrot.slane %v278, 2
      %v844 = vrot.slane %v279, 2
      %v845 = vsel %vm792, %v843, %v844
      %v846 = vrot.slane %v280, 2
      %v847 = vsel %vm792, %v844, %v846
      %v848 = vrot.slane %v281, 2
      %v849 = vrot.slane %v282, 2
      %v850 = vsel %vm792, %v848, %v849
      %v851 = vrot.slane %v283, 2
      %v852 = vsel %vm792, %v849, %v851
      %v853 = vrot.slane %v284, 2
      %v854 = vrot.slane %v285, 2
      %v855 = vsel %vm792, %v853, %v854
      %v856 = vrot.slane %v286, 2
      %v857 = vsel %vm792, %v854, %v856
      %v858 = vrot.slane %v287, 2
      %v859 = vrot.slane %v288, 2
      %v860 = vsel %vm792, %v858, %v859
      %v861 = vrot.slane %v289, 2
      %v862 = vsel %vm792, %v859, %v861
      %v863 = vrot.slane %v290, 2
      %v864 = vrot.slane %v291, 2
      %v865 = vsel %vm792, %v863, %v864
      %v866 = vrot.slane %v292, 2
      %v867 = vsel %vm792, %v864, %v866
      %v868 = vrot.slane %v293, 2
      %v869 = vrot.slane %v294, 2
      %v870 = vsel %vm792, %v868, %v869
      %v871 = vrot.slane %v295, 2
      %v872 = vsel %vm792, %v869, %v871
      %s873 = scalar_lea.vmem %s1, 4
      %v874 = vld [vmem:[%s873] sm:$0x3]
      %v875 = vunpack.c.l.bf16 %v874
      %v876 = vsel %vm430, %v795, 0
      %v878 = vsel %vm430, %v797, 0
      %v880 = vsel %vm430, %v800, 0
      %v882 = vsel %vm430, %v802, 0
      %v884 = vsel %vm430, %v805, 0
      %v886 = vsel %vm430, %v807, 0
      %v888 = vsel %vm430, %v810, 0
      %v890 = vsel %vm430, %v812, 0
      %v892 = vsel %vm430, %v815, 0
      %v894 = vsel %vm430, %v817, 0
      %v896 = vsel %vm430, %v820, 0
      %v898 = vsel %vm430, %v822, 0
      %v900 = vsel %vm430, %v825, 0
      %v902 = vsel %vm430, %v827, 0
      %v904 = vsel %vm430, %v830, 0
      %v906 = vsel %vm430, %v832, 0
      %v908 = vsel %vm430, %v835, 0
      %v910 = vsel %vm430, %v837, 0
      %v912 = vsel %vm430, %v840, 0
      %v914 = vsel %vm430, %v842, 0
      %v916 = vsel %vm430, %v845, 0
      %v918 = vsel %vm430, %v847, 0
      %v920 = vsel %vm430, %v850, 0
      %v922 = vsel %vm430, %v852, 0
      %v924 = vsel %vm430, %v855, 0
      %v926 = vsel %vm430, %v857, 0
      %v928 = vsel %vm430, %v860, 0
      %v930 = vsel %vm430, %v862, 0
      %v932 = vsel %vm430, %v865, 0
      %v934 = vsel %vm430, %v867, 0
      %v936 = vsel %vm430, %v870, 0
      %v938 = vsel %vm430, %v872, 0
      %v941 = vsel %vm495, %v875, 0
      %943 = vmatpush.msra.mxu0 0.0
      %944 = vmatpush.msra.mxu0 0.0
      %945 = vmatpush.msra.mxu0 0.0
      %946 = vmatpush.msra.mxu0 0.0
      %947 = vmatpush.msra.mxu0 0.0
      %948 = vmatpush.msra.mxu0 0.0
      %949 = vmatpush.msra.mxu0 0.0
      %950 = vmatpush.msra.mxu0 0.0
      %951 = vmatpush.msra.mxu0 0.0
      %952 = vmatpush.msra.mxu0 0.0
      %953 = vmatpush.msra.mxu0 0.0
      %954 = vmatpush.msra.mxu0 0.0
      %955 = vmatpush.msra.mxu0 0.0
      %956 = vmatpush.msra.mxu0 0.0
      %957 = vmatpush.msra.mxu0 0.0
      %958 = vmatpush.msra.mxu0 %v941
      %959 = vmatmul.f32.gmra.mxu0 %v876
      %v960 = vpop.f32.mrf.mxu0
      %v961 = vadd.f32 0.0, %v960
      %962 = vmatmul.f32.gmra.mxu0 %v878
      %v963 = vpop.f32.mrf.mxu0
      %v964 = vadd.f32 0.0, %v963
      %965 = vmatmul.f32.gmra.mxu0 %v880
      %v966 = vpop.f32.mrf.mxu0
      %v967 = vadd.f32 0.0, %v966
      %968 = vmatmul.f32.gmra.mxu0 %v882
      %v969 = vpop.f32.mrf.mxu0
      %v970 = vadd.f32 0.0, %v969
      %971 = vmatmul.f32.gmra.mxu0 %v884
      %v972 = vpop.f32.mrf.mxu0
      %v973 = vadd.f32 0.0, %v972
      %974 = vmatmul.f32.gmra.mxu0 %v886
      %v975 = vpop.f32.mrf.mxu0
      %v976 = vadd.f32 0.0, %v975
      %977 = vmatmul.f32.gmra.mxu0 %v888
      %v978 = vpop.f32.mrf.mxu0
      %v979 = vadd.f32 0.0, %v978
      %980 = vmatmul.f32.gmra.mxu0 %v890
      %v981 = vpop.f32.mrf.mxu0
      %v982 = vadd.f32 0.0, %v981
      %983 = vmatmul.f32.gmra.mxu0 %v892
      %v984 = vpop.f32.mrf.mxu0
      %v985 = vadd.f32 0.0, %v984
      %986 = vmatmul.f32.gmra.mxu0 %v894
      %v987 = vpop.f32.mrf.mxu0
      %v988 = vadd.f32 0.0, %v987
      %989 = vmatmul.f32.gmra.mxu0 %v896
      %v990 = vpop.f32.mrf.mxu0
      %v991 = vadd.f32 0.0, %v990
      %992 = vmatmul.f32.gmra.mxu0 %v898
      %v993 = vpop.f32.mrf.mxu0
      %v994 = vadd.f32 0.0, %v993
      %995 = vmatmul.f32.gmra.mxu0 %v900
      %v996 = vpop.f32.mrf.mxu0
      %v997 = vadd.f32 0.0, %v996
      %998 = vmatmul.f32.gmra.mxu0 %v902
      %v999 = vpop.f32.mrf.mxu0
      %v1000 = vadd.f32 0.0, %v999
      %1001 = vmatmul.f32.gmra.mxu0 %v904
      %v1002 = vpop.f32.mrf.mxu0
      %v1003 = vadd.f32 0.0, %v1002
      %1004 = vmatmul.f32.gmra.mxu0 %v906
      %v1005 = vpop.f32.mrf.mxu0
      %v1006 = vadd.f32 0.0, %v1005
      %1007 = vmatmul.f32.gmra.mxu0 %v908
      %v1008 = vpop.f32.mrf.mxu0
      %v1009 = vadd.f32 0.0, %v1008
      %1010 = vmatmul.f32.gmra.mxu0 %v910
      %v1011 = vpop.f32.mrf.mxu0
      %v1012 = vadd.f32 0.0, %v1011
      %1013 = vmatmul.f32.gmra.mxu0 %v912
      %v1014 = vpop.f32.mrf.mxu0
      %v1015 = vadd.f32 0.0, %v1014
      %1016 = vmatmul.f32.gmra.mxu0 %v914
      %v1017 = vpop.f32.mrf.mxu0
      %v1018 = vadd.f32 0.0, %v1017
      %1019 = vmatmul.f32.gmra.mxu0 %v916
      %v1020 = vpop.f32.mrf.mxu0
      %v1021 = vadd.f32 0.0, %v1020
      %1022 = vmatmul.f32.gmra.mxu0 %v918
      %v1023 = vpop.f32.mrf.mxu0
      %v1024 = vadd.f32 0.0, %v1023
      %1025 = vmatmul.f32.gmra.mxu0 %v920
      %v1026 = vpop.f32.mrf.mxu0
      %v1027 = vadd.f32 0.0, %v1026
      %1028 = vmatmul.f32.gmra.mxu0 %v922
      %v1029 = vpop.f32.mrf.mxu0
      %v1030 = vadd.f32 0.0, %v1029
      %1031 = vmatmul.f32.gmra.mxu0 %v924
      %v1032 = vpop.f32.mrf.mxu0
      %v1033 = vadd.f32 0.0, %v1032
      %1034 = vmatmul.f32.gmra.mxu0 %v926
      %v1035 = vpop.f32.mrf.mxu0
      %v1036 = vadd.f32 0.0, %v1035
      %1037 = vmatmul.f32.gmra.mxu0 %v928
      %v1038 = vpop.f32.mrf.mxu0
      %v1039 = vadd.f32 0.0, %v1038
      %1040 = vmatmul.f32.gmra.mxu0 %v930
      %v1041 = vpop.f32.mrf.mxu0
      %v1042 = vadd.f32 0.0, %v1041
      %1043 = vmatmul.f32.gmra.mxu0 %v932
      %v1044 = vpop.f32.mrf.mxu0
      %v1045 = vadd.f32 0.0, %v1044
      %1046 = vmatmul.f32.gmra.mxu0 %v934
      %v1047 = vpop.f32.mrf.mxu0
      %v1048 = vadd.f32 0.0, %v1047
      %1049 = vmatmul.f32.gmra.mxu0 %v936
      %v1050 = vpop.f32.mrf.mxu0
      %v1051 = vadd.f32 0.0, %v1050
      %1052 = vmatmul.f32.gmra.mxu0 %v938
      %v1053 = vpop.f32.mrf.mxu0
      %v1054 = vadd.f32 0.0, %v1053
      %1055 = vdwg.mxu0
      %v1056 = vadd.f32 %v697, %v961
      %v1057 = vadd.f32 %v700, %v964
      %v1058 = vadd.f32 %v703, %v967
      %v1059 = vadd.f32 %v706, %v970
      %v1060 = vadd.f32 %v709, %v973
      %v1061 = vadd.f32 %v712, %v976
      %v1062 = vadd.f32 %v715, %v979
      %v1063 = vadd.f32 %v718, %v982
      %v1064 = vadd.f32 %v721, %v985
      %v1065 = vadd.f32 %v724, %v988
      %v1066 = vadd.f32 %v727, %v991
      %v1067 = vadd.f32 %v730, %v994
      %v1068 = vadd.f32 %v733, %v997
      %v1069 = vadd.f32 %v736, %v1000
      %v1070 = vadd.f32 %v739, %v1003
      %v1071 = vadd.f32 %v742, %v1006
      %v1072 = vadd.f32 %v745, %v1009
      %v1073 = vadd.f32 %v748, %v1012
      %v1074 = vadd.f32 %v751, %v1015
      %v1075 = vadd.f32 %v754, %v1018
      %v1076 = vadd.f32 %v757, %v1021
      %v1077 = vadd.f32 %v760, %v1024
      %v1078 = vadd.f32 %v763, %v1027
      %v1079 = vadd.f32 %v766, %v1030
      %v1080 = vadd.f32 %v769, %v1033
      %v1081 = vadd.f32 %v772, %v1036
      %v1082 = vadd.f32 %v775, %v1039
      %v1083 = vadd.f32 %v778, %v1042
      %v1084 = vadd.f32 %v781, %v1045
      %v1085 = vadd.f32 %v784, %v1048
      %v1086 = vadd.f32 %v787, %v1051
      %v1087 = vadd.f32 %v790, %v1054
      %s1088 = sadd.s32 %s196, 1
      %s1089 = smul.u32 %s1088, 3
      %s1090 = smul.addr %s1089, 4
      %s1091 = scalar_lea.vmem %s184, %s1090
      %v1092 = vld [vmem:[%s1091] sm:$0xf]
      %v1093 = vld [vmem:[%s1091 + $0x4] sm:$0xf]
      %v1094 = vld [vmem:[%s1091 + $0x8] sm:$0x1]
      %v1095 = vld [vmem:[%s1091 + $0xc] sm:$0xf]
      %v1096 = vld [vmem:[%s1091 + $0x10] sm:$0xf]
      %v1097 = vld [vmem:[%s1091 + $0x14] sm:$0x1]
      %v1098 = vld [vmem:[%s1091 + $0x18] sm:$0xf]
      %v1099 = vld [vmem:[%s1091 + $0x1c] sm:$0xf]
      %v1100 = vld [vmem:[%s1091 + $0x20] sm:$0x1]
      %v1101 = vld [vmem:[%s1091 + $0x24] sm:$0xf]
      %v1102 = vld [vmem:[%s1091 + $0x28] sm:$0xf]
      %v1103 = vld [vmem:[%s1091 + $0x2c] sm:$0x1]
      %v1104 = vld [vmem:[%s1091 + $0x30] sm:$0xf]
      %v1105 = vld [vmem:[%s1091 + $0x34] sm:$0xf]
      %v1106 = vld [vmem:[%s1091 + $0x38] sm:$0x1]
      %v1107 = vld [vmem:[%s1091 + $0x3c] sm:$0xf]
      %v1108 = vld [vmem:[%s1091 + $0x40] sm:$0xf]
      %v1109 = vld [vmem:[%s1091 + $0x44] sm:$0x1]
      %v1110 = vld [vmem:[%s1091 + $0x48] sm:$0xf]
      %v1111 = vld [vmem:[%s1091 + $0x4c] sm:$0xf]
      %v1112 = vld [vmem:[%s1091 + $0x50] sm:$0x1]
      %v1113 = vld [vmem:[%s1091 + $0x54] sm:$0xf]
      %v1114 = vld [vmem:[%s1091 + $0x58] sm:$0xf]
      %v1115 = vld [vmem:[%s1091 + $0x5c] sm:$0x1]
      %v1116 = vld [vmem:[%s1091 + $0x60] sm:$0xf]
      %v1117 = vld [vmem:[%s1091 + $0x64] sm:$0xf]
      %v1118 = vld [vmem:[%s1091 + $0x68] sm:$0x1]
      %v1119 = vld [vmem:[%s1091 + $0x6c] sm:$0xf]
      %v1120 = vld [vmem:[%s1091 + $0x70] sm:$0xf]
      %v1121 = vld [vmem:[%s1091 + $0x74] sm:$0x1]
      %v1122 = vld [vmem:[%s1091 + $0x78] sm:$0xf]
      %v1123 = vld [vmem:[%s1091 + $0x7c] sm:$0xf]
      %v1124 = vld [vmem:[%s1091 + $0x80] sm:$0x1]
      %v1125 = vld [vmem:[%s1091 + $0x84] sm:$0xf]
      %v1126 = vld [vmem:[%s1091 + $0x88] sm:$0xf]
      %v1127 = vld [vmem:[%s1091 + $0x8c] sm:$0x1]
      %v1128 = vld [vmem:[%s1091 + $0x90] sm:$0xf]
      %v1129 = vld [vmem:[%s1091 + $0x94] sm:$0xf]
      %v1130 = vld [vmem:[%s1091 + $0x98] sm:$0x1]
      %v1131 = vld [vmem:[%s1091 + $0x9c] sm:$0xf]
      %v1132 = vld [vmem:[%s1091 + $0xa0] sm:$0xf]
      %v1133 = vld [vmem:[%s1091 + $0xa4] sm:$0x1]
      %v1134 = vld [vmem:[%s1091 + $0xa8] sm:$0xf]
      %v1135 = vld [vmem:[%s1091 + $0xac] sm:$0xf]
      %v1136 = vld [vmem:[%s1091 + $0xb0] sm:$0x1]
      %v1137 = vld [vmem:[%s1091 + $0xb4] sm:$0xf]
      %v1138 = vld [vmem:[%s1091 + $0xb8] sm:$0xf]
      %v1139 = vld [vmem:[%s1091 + $0xbc] sm:$0x1]
      %v1140 = vunpack.c.l.bf16 %v1092
      %v1141 = vunpack.c.l.bf16 %v1093
      %v1142 = vunpack.c.l.bf16 %v1094
      %v1143 = vunpack.c.l.bf16 %v1095
      %v1144 = vunpack.c.l.bf16 %v1096
      %v1145 = vunpack.c.l.bf16 %v1097
      %v1146 = vunpack.c.l.bf16 %v1098
      %v1147 = vunpack.c.l.bf16 %v1099
      %v1148 = vunpack.c.l.bf16 %v1100
      %v1149 = vunpack.c.l.bf16 %v1101
      %v1150 = vunpack.c.l.bf16 %v1102
      %v1151 = vunpack.c.l.bf16 %v1103
      %v1152 = vunpack.c.l.bf16 %v1104
      %v1153 = vunpack.c.l.bf16 %v1105
      %v1154 = vunpack.c.l.bf16 %v1106
      %v1155 = vunpack.c.l.bf16 %v1107
      %v1156 = vunpack.c.l.bf16 %v1108
      %v1157 = vunpack.c.l.bf16 %v1109
      %v1158 = vunpack.c.l.bf16 %v1110
      %v1159 = vunpack.c.l.bf16 %v1111
      %v1160 = vunpack.c.l.bf16 %v1112
      %v1161 = vunpack.c.l.bf16 %v1113
      %v1162 = vunpack.c.l.bf16 %v1114
      %v1163 = vunpack.c.l.bf16 %v1115
      %v1164 = vunpack.c.l.bf16 %v1116
      %v1165 = vunpack.c.l.bf16 %v1117
      %v1166 = vunpack.c.l.bf16 %v1118
      %v1167 = vunpack.c.l.bf16 %v1119
      %v1168 = vunpack.c.l.bf16 %v1120
      %v1169 = vunpack.c.l.bf16 %v1121
      %v1170 = vunpack.c.l.bf16 %v1122
      %v1171 = vunpack.c.l.bf16 %v1123
      %v1172 = vunpack.c.l.bf16 %v1124
      %v1173 = vunpack.c.l.bf16 %v1125
      %v1174 = vunpack.c.l.bf16 %v1126
      %v1175 = vunpack.c.l.bf16 %v1127
      %v1176 = vunpack.c.l.bf16 %v1128
      %v1177 = vunpack.c.l.bf16 %v1129
      %v1178 = vunpack.c.l.bf16 %v1130
      %v1179 = vunpack.c.l.bf16 %v1131
      %v1180 = vunpack.c.l.bf16 %v1132
      %v1181 = vunpack.c.l.bf16 %v1133
      %v1182 = vunpack.c.l.bf16 %v1134
      %v1183 = vunpack.c.l.bf16 %v1135
      %v1184 = vunpack.c.l.bf16 %v1136
      %v1185 = vunpack.c.l.bf16 %v1137
      %v1186 = vunpack.c.l.bf16 %v1138
      %v1187 = vunpack.c.l.bf16 %v1139
      %s1188 = scalar_lea.vmem %s1, 6
      %v1189 = vld [vmem:[%s1188] sm:$0x3]
      %v1190 = vunpack.c.l.bf16 %v1189
      %v1192 = vsel %vm430, %v1140, 0
      %v1195 = vsel %vm430, %v1141, 0
      %v1198 = vsel %vm430, %v1143, 0
      %v1201 = vsel %vm430, %v1144, 0
      %v1204 = vsel %vm430, %v1146, 0
      %v1207 = vsel %vm430, %v1147, 0
      %v1210 = vsel %vm430, %v1149, 0
      %v1213 = vsel %vm430, %v1150, 0
      %v1216 = vsel %vm430, %v1152, 0
      %v1219 = vsel %vm430, %v1153, 0
      %v1222 = vsel %vm430, %v1155, 0
      %v1225 = vsel %vm430, %v1156, 0
      %v1228 = vsel %vm430, %v1158, 0
      %v1231 = vsel %vm430, %v1159, 0
      %v1234 = vsel %vm430, %v1161, 0
      %v1237 = vsel %vm430, %v1162, 0
      %v1240 = vsel %vm430, %v1164, 0
      %v1243 = vsel %vm430, %v1165, 0
      %v1246 = vsel %vm430, %v1167, 0
      %v1249 = vsel %vm430, %v1168, 0
      %v1252 = vsel %vm430, %v1170, 0
      %v1255 = vsel %vm430, %v1171, 0
      %v1258 = vsel %vm430, %v1173, 0
      %v1261 = vsel %vm430, %v1174, 0
      %v1264 = vsel %vm430, %v1176, 0
      %v1267 = vsel %vm430, %v1177, 0
      %v1270 = vsel %vm430, %v1179, 0
      %v1273 = vsel %vm430, %v1180, 0
      %v1276 = vsel %vm430, %v1182, 0
      %v1279 = vsel %vm430, %v1183, 0
      %v1282 = vsel %vm430, %v1185, 0
      %v1285 = vsel %vm430, %v1186, 0
      %v1288 = vsel %vm495, %v1190, 0
      %1290 = vmatpush.msra.mxu0 0.0
      %1291 = vmatpush.msra.mxu0 0.0
      %1292 = vmatpush.msra.mxu0 0.0
      %1293 = vmatpush.msra.mxu0 0.0
      %1294 = vmatpush.msra.mxu0 0.0
      %1295 = vmatpush.msra.mxu0 0.0
      %1296 = vmatpush.msra.mxu0 0.0
      %1297 = vmatpush.msra.mxu0 0.0
      %1298 = vmatpush.msra.mxu0 0.0
      %1299 = vmatpush.msra.mxu0 0.0
      %1300 = vmatpush.msra.mxu0 0.0
      %1301 = vmatpush.msra.mxu0 0.0
      %1302 = vmatpush.msra.mxu0 0.0
      %1303 = vmatpush.msra.mxu0 0.0
      %1304 = vmatpush.msra.mxu0 0.0
      %1305 = vmatpush.msra.mxu0 %v1288
      %1306 = vmatmul.f32.gmra.mxu0 %v1192
      %v1307 = vpop.f32.mrf.mxu0
      %v1308 = vadd.f32 0.0, %v1307
      %1309 = vmatmul.f32.gmra.mxu0 %v1195
      %v1310 = vpop.f32.mrf.mxu0
      %v1311 = vadd.f32 0.0, %v1310
      %1312 = vmatmul.f32.gmra.mxu0 %v1198
      %v1313 = vpop.f32.mrf.mxu0
      %v1314 = vadd.f32 0.0, %v1313
      %1315 = vmatmul.f32.gmra.mxu0 %v1201
      %v1316 = vpop.f32.mrf.mxu0
      %v1317 = vadd.f32 0.0, %v1316
      %1318 = vmatmul.f32.gmra.mxu0 %v1204
      %v1319 = vpop.f32.mrf.mxu0
      %v1320 = vadd.f32 0.0, %v1319
      %1321 = vmatmul.f32.gmra.mxu0 %v1207
      %v1322 = vpop.f32.mrf.mxu0
      %v1323 = vadd.f32 0.0, %v1322
      %1324 = vmatmul.f32.gmra.mxu0 %v1210
      %v1325 = vpop.f32.mrf.mxu0
      %v1326 = vadd.f32 0.0, %v1325
      %1327 = vmatmul.f32.gmra.mxu0 %v1213
      %v1328 = vpop.f32.mrf.mxu0
      %v1329 = vadd.f32 0.0, %v1328
      %1330 = vmatmul.f32.gmra.mxu0 %v1216
      %v1331 = vpop.f32.mrf.mxu0
      %v1332 = vadd.f32 0.0, %v1331
      %1333 = vmatmul.f32.gmra.mxu0 %v1219
      %v1334 = vpop.f32.mrf.mxu0
      %v1335 = vadd.f32 0.0, %v1334
      %1336 = vmatmul.f32.gmra.mxu0 %v1222
      %v1337 = vpop.f32.mrf.mxu0
      %v1338 = vadd.f32 0.0, %v1337
      %1339 = vmatmul.f32.gmra.mxu0 %v1225
      %v1340 = vpop.f32.mrf.mxu0
      %v1341 = vadd.f32 0.0, %v1340
      %1342 = vmatmul.f32.gmra.mxu0 %v1228
      %v1343 = vpop.f32.mrf.mxu0
      %v1344 = vadd.f32 0.0, %v1343
      %1345 = vmatmul.f32.gmra.mxu0 %v1231
      %v1346 = vpop.f32.mrf.mxu0
      %v1347 = vadd.f32 0.0, %v1346
      %1348 = vmatmul.f32.gmra.mxu0 %v1234
      %v1349 = vpop.f32.mrf.mxu0
      %v1350 = vadd.f32 0.0, %v1349
      %1351 = vmatmul.f32.gmra.mxu0 %v1237
      %v1352 = vpop.f32.mrf.mxu0
      %v1353 = vadd.f32 0.0, %v1352
      %1354 = vmatmul.f32.gmra.mxu0 %v1240
      %v1355 = vpop.f32.mrf.mxu0
      %v1356 = vadd.f32 0.0, %v1355
      %1357 = vmatmul.f32.gmra.mxu0 %v1243
      %v1358 = vpop.f32.mrf.mxu0
      %v1359 = vadd.f32 0.0, %v1358
      %1360 = vmatmul.f32.gmra.mxu0 %v1246
      %v1361 = vpop.f32.mrf.mxu0
      %v1362 = vadd.f32 0.0, %v1361
      %1363 = vmatmul.f32.gmra.mxu0 %v1249
      %v1364 = vpop.f32.mrf.mxu0
      %v1365 = vadd.f32 0.0, %v1364
      %1366 = vmatmul.f32.gmra.mxu0 %v1252
      %v1367 = vpop.f32.mrf.mxu0
      %v1368 = vadd.f32 0.0, %v1367
      %1369 = vmatmul.f32.gmra.mxu0 %v1255
      %v1370 = vpop.f32.mrf.mxu0
      %v1371 = vadd.f32 0.0, %v1370
      %1372 = vmatmul.f32.gmra.mxu0 %v1258
      %v1373 = vpop.f32.mrf.mxu0
      %v1374 = vadd.f32 0.0, %v1373
      %1375 = vmatmul.f32.gmra.mxu0 %v1261
      %v1376 = vpop.f32.mrf.mxu0
      %v1377 = vadd.f32 0.0, %v1376
      %1378 = vmatmul.f32.gmra.mxu0 %v1264
      %v1379 = vpop.f32.mrf.mxu0
      %v1380 = vadd.f32 0.0, %v1379
      %1381 = vmatmul.f32.gmra.mxu0 %v1267
      %v1382 = vpop.f32.mrf.mxu0
      %v1383 = vadd.f32 0.0, %v1382
      %1384 = vmatmul.f32.gmra.mxu0 %v1270
      %v1385 = vpop.f32.mrf.mxu0
      %v1386 = vadd.f32 0.0, %v1385
      %1387 = vmatmul.f32.gmra.mxu0 %v1273
      %v1388 = vpop.f32.mrf.mxu0
      %v1389 = vadd.f32 0.0, %v1388
      %1390 = vmatmul.f32.gmra.mxu0 %v1276
      %v1391 = vpop.f32.mrf.mxu0
      %v1392 = vadd.f32 0.0, %v1391
      %1393 = vmatmul.f32.gmra.mxu0 %v1279
      %v1394 = vpop.f32.mrf.mxu0
      %v1395 = vadd.f32 0.0, %v1394
      %1396 = vmatmul.f32.gmra.mxu0 %v1282
      %v1397 = vpop.f32.mrf.mxu0
      %v1398 = vadd.f32 0.0, %v1397
      %1399 = vmatmul.f32.gmra.mxu0 %v1285
      %v1400 = vpop.f32.mrf.mxu0
      %v1401 = vadd.f32 0.0, %v1400
      %1402 = vdwg.mxu0
      %v1403 = vadd.f32 %v1056, %v1308
      %v1404 = vadd.f32 %v1057, %v1311
      %v1405 = vadd.f32 %v1058, %v1314
      %v1406 = vadd.f32 %v1059, %v1317
      %v1407 = vadd.f32 %v1060, %v1320
      %v1408 = vadd.f32 %v1061, %v1323
      %v1409 = vadd.f32 %v1062, %v1326
      %v1410 = vadd.f32 %v1063, %v1329
      %v1411 = vadd.f32 %v1064, %v1332
      %v1412 = vadd.f32 %v1065, %v1335
      %v1413 = vadd.f32 %v1066, %v1338
      %v1414 = vadd.f32 %v1067, %v1341
      %v1415 = vadd.f32 %v1068, %v1344
      %v1416 = vadd.f32 %v1069, %v1347
      %v1417 = vadd.f32 %v1070, %v1350
      %v1418 = vadd.f32 %v1071, %v1353
      %v1419 = vadd.f32 %v1072, %v1356
      %v1420 = vadd.f32 %v1073, %v1359
      %v1421 = vadd.f32 %v1074, %v1362
      %v1422 = vadd.f32 %v1075, %v1365
      %v1423 = vadd.f32 %v1076, %v1368
      %v1424 = vadd.f32 %v1077, %v1371
      %v1425 = vadd.f32 %v1078, %v1374
      %v1426 = vadd.f32 %v1079, %v1377
      %v1427 = vadd.f32 %v1080, %v1380
      %v1428 = vadd.f32 %v1081, %v1383
      %v1429 = vadd.f32 %v1082, %v1386
      %v1430 = vadd.f32 %v1083, %v1389
      %v1431 = vadd.f32 %v1084, %v1392
      %v1432 = vadd.f32 %v1085, %v1395
      %v1433 = vadd.f32 %v1086, %v1398
      %v1434 = vadd.f32 %v1087, %v1401
      %v1451 = vrot.slane %v1140, 1
      %v1452 = vrot.slane %v1141, 1
      %v1453 = vsel %vm346, %v1451, %v1452
      %v1454 = vrot.slane %v1142, 1
      %v1455 = vsel %vm346, %v1452, %v1454
      %v1456 = vrot.slane %v1143, 1
      %v1457 = vrot.slane %v1144, 1
      %v1458 = vsel %vm346, %v1456, %v1457
      %v1459 = vrot.slane %v1145, 1
      %v1460 = vsel %vm346, %v1457, %v1459
      %v1461 = vrot.slane %v1146, 1
      %v1462 = vrot.slane %v1147, 1
      %v1463 = vsel %vm346, %v1461, %v1462
      %v1464 = vrot.slane %v1148, 1
      %v1465 = vsel %vm346, %v1462, %v1464
      %v1466 = vrot.slane %v1149, 1
      %v1467 = vrot.slane %v1150, 1
      %v1468 = vsel %vm346, %v1466, %v1467
      %v1469 = vrot.slane %v1151, 1
      %v1470 = vsel %vm346, %v1467, %v1469
      %v1471 = vrot.slane %v1152, 1
      %v1472 = vrot.slane %v1153, 1
      %v1473 = vsel %vm346, %v1471, %v1472
      %v1474 = vrot.slane %v1154, 1
      %v1475 = vsel %vm346, %v1472, %v1474
      %v1476 = vrot.slane %v1155, 1
      %v1477 = vrot.slane %v1156, 1
      %v1478 = vsel %vm346, %v1476, %v1477
      %v1479 = vrot.slane %v1157, 1
      %v1480 = vsel %vm346, %v1477, %v1479
      %v1481 = vrot.slane %v1158, 1
      %v1482 = vrot.slane %v1159, 1
      %v1483 = vsel %vm346, %v1481, %v1482
      %v1484 = vrot.slane %v1160, 1
      %v1485 = vsel %vm346, %v1482, %v1484
      %v1486 = vrot.slane %v1161, 1
      %v1487 = vrot.slane %v1162, 1
      %v1488 = vsel %vm346, %v1486, %v1487
      %v1489 = vrot.slane %v1163, 1
      %v1490 = vsel %vm346, %v1487, %v1489
      %v1491 = vrot.slane %v1164, 1
      %v1492 = vrot.slane %v1165, 1
      %v1493 = vsel %vm346, %v1491, %v1492
      %v1494 = vrot.slane %v1166, 1
      %v1495 = vsel %vm346, %v1492, %v1494
      %v1496 = vrot.slane %v1167, 1
      %v1497 = vrot.slane %v1168, 1
      %v1498 = vsel %vm346, %v1496, %v1497
      %v1499 = vrot.slane %v1169, 1
      %v1500 = vsel %vm346, %v1497, %v1499
      %v1501 = vrot.slane %v1170, 1
      %v1502 = vrot.slane %v1171, 1
      %v1503 = vsel %vm346, %v1501, %v1502
      %v1504 = vrot.slane %v1172, 1
      %v1505 = vsel %vm346, %v1502, %v1504
      %v1506 = vrot.slane %v1173, 1
      %v1507 = vrot.slane %v1174, 1
      %v1508 = vsel %vm346, %v1506, %v1507
      %v1509 = vrot.slane %v1175, 1
      %v1510 = vsel %vm346, %v1507, %v1509
      %v1511 = vrot.slane %v1176, 1
      %v1512 = vrot.slane %v1177, 1
      %v1513 = vsel %vm346, %v1511, %v1512
      %v1514 = vrot.slane %v1178, 1
      %v1515 = vsel %vm346, %v1512, %v1514
      %v1516 = vrot.slane %v1179, 1
      %v1517 = vrot.slane %v1180, 1
      %v1518 = vsel %vm346, %v1516, %v1517
      %v1519 = vrot.slane %v1181, 1
      %v1520 = vsel %vm346, %v1517, %v1519
      %v1521 = vrot.slane %v1182, 1
      %v1522 = vrot.slane %v1183, 1
      %v1523 = vsel %vm346, %v1521, %v1522
      %v1524 = vrot.slane %v1184, 1
      %v1525 = vsel %vm346, %v1522, %v1524
      %v1526 = vrot.slane %v1185, 1
      %v1527 = vrot.slane %v1186, 1
      %v1528 = vsel %vm346, %v1526, %v1527
      %v1529 = vrot.slane %v1187, 1
      %v1530 = vsel %vm346, %v1527, %v1529
      %s1531 = scalar_lea.vmem %s1, 8
      %v1532 = vld [vmem:[%s1531] sm:$0x3]
      %v1533 = vunpack.c.l.bf16 %v1532
      %v1534 = vsel %vm430, %v1453, 0
      %v1536 = vsel %vm430, %v1455, 0
      %v1538 = vsel %vm430, %v1458, 0
      %v1540 = vsel %vm430, %v1460, 0
      %v1542 = vsel %vm430, %v1463, 0
      %v1544 = vsel %vm430, %v1465, 0
      %v1546 = vsel %vm430, %v1468, 0
      %v1548 = vsel %vm430, %v1470, 0
      %v1550 = vsel %vm430, %v1473, 0
      %v1552 = vsel %vm430, %v1475, 0
      %v1554 = vsel %vm430, %v1478, 0
      %v1556 = vsel %vm430, %v1480, 0
      %v1558 = vsel %vm430, %v1483, 0
      %v1560 = vsel %vm430, %v1485, 0
      %v1562 = vsel %vm430, %v1488, 0
      %v1564 = vsel %vm430, %v1490, 0
      %v1566 = vsel %vm430, %v1493, 0
      %v1568 = vsel %vm430, %v1495, 0
      %v1570 = vsel %vm430, %v1498, 0
      %v1572 = vsel %vm430, %v1500, 0
      %v1574 = vsel %vm430, %v1503, 0
      %v1576 = vsel %vm430, %v1505, 0
      %v1578 = vsel %vm430, %v1508, 0
      %v1580 = vsel %vm430, %v1510, 0
      %v1582 = vsel %vm430, %v1513, 0
      %v1584 = vsel %vm430, %v1515, 0
      %v1586 = vsel %vm430, %v1518, 0
      %v1588 = vsel %vm430, %v1520, 0
      %v1590 = vsel %vm430, %v1523, 0
      %v1592 = vsel %vm430, %v1525, 0
      %v1594 = vsel %vm430, %v1528, 0
      %v1596 = vsel %vm430, %v1530, 0
      %v1599 = vsel %vm495, %v1533, 0
      %1601 = vmatpush.msra.mxu0 0.0
      %1602 = vmatpush.msra.mxu0 0.0
      %1603 = vmatpush.msra.mxu0 0.0
      %1604 = vmatpush.msra.mxu0 0.0
      %1605 = vmatpush.msra.mxu0 0.0
      %1606 = vmatpush.msra.mxu0 0.0
      %1607 = vmatpush.msra.mxu0 0.0
      %1608 = vmatpush.msra.mxu0 0.0
      %1609 = vmatpush.msra.mxu0 0.0
      %1610 = vmatpush.msra.mxu0 0.0
      %1611 = vmatpush.msra.mxu0 0.0
      %1612 = vmatpush.msra.mxu0 0.0
      %1613 = vmatpush.msra.mxu0 0.0
      %1614 = vmatpush.msra.mxu0 0.0
      %1615 = vmatpush.msra.mxu0 0.0
      %1616 = vmatpush.msra.mxu0 %v1599
      %1617 = vmatmul.f32.gmra.mxu0 %v1534
      %v1618 = vpop.f32.mrf.mxu0
      %v1619 = vadd.f32 0.0, %v1618
      %1620 = vmatmul.f32.gmra.mxu0 %v1536
      %v1621 = vpop.f32.mrf.mxu0
      %v1622 = vadd.f32 0.0, %v1621
      %1623 = vmatmul.f32.gmra.mxu0 %v1538
      %v1624 = vpop.f32.mrf.mxu0
      %v1625 = vadd.f32 0.0, %v1624
      %1626 = vmatmul.f32.gmra.mxu0 %v1540
      %v1627 = vpop.f32.mrf.mxu0
      %v1628 = vadd.f32 0.0, %v1627
      %1629 = vmatmul.f32.gmra.mxu0 %v1542
      %v1630 = vpop.f32.mrf.mxu0
      %v1631 = vadd.f32 0.0, %v1630
      %1632 = vmatmul.f32.gmra.mxu0 %v1544
      %v1633 = vpop.f32.mrf.mxu0
      %v1634 = vadd.f32 0.0, %v1633
      %1635 = vmatmul.f32.gmra.mxu0 %v1546
      %v1636 = vpop.f32.mrf.mxu0
      %v1637 = vadd.f32 0.0, %v1636
      %1638 = vmatmul.f32.gmra.mxu0 %v1548
      %v1639 = vpop.f32.mrf.mxu0
      %v1640 = vadd.f32 0.0, %v1639
      %1641 = vmatmul.f32.gmra.mxu0 %v1550
      %v1642 = vpop.f32.mrf.mxu0
      %v1643 = vadd.f32 0.0, %v1642
      %1644 = vmatmul.f32.gmra.mxu0 %v1552
      %v1645 = vpop.f32.mrf.mxu0
      %v1646 = vadd.f32 0.0, %v1645
      %1647 = vmatmul.f32.gmra.mxu0 %v1554
      %v1648 = vpop.f32.mrf.mxu0
      %v1649 = vadd.f32 0.0, %v1648
      %1650 = vmatmul.f32.gmra.mxu0 %v1556
      %v1651 = vpop.f32.mrf.mxu0
      %v1652 = vadd.f32 0.0, %v1651
      %1653 = vmatmul.f32.gmra.mxu0 %v1558
      %v1654 = vpop.f32.mrf.mxu0
      %v1655 = vadd.f32 0.0, %v1654
      %1656 = vmatmul.f32.gmra.mxu0 %v1560
      %v1657 = vpop.f32.mrf.mxu0
      %v1658 = vadd.f32 0.0, %v1657
      %1659 = vmatmul.f32.gmra.mxu0 %v1562
      %v1660 = vpop.f32.mrf.mxu0
      %v1661 = vadd.f32 0.0, %v1660
      %1662 = vmatmul.f32.gmra.mxu0 %v1564
      %v1663 = vpop.f32.mrf.mxu0
      %v1664 = vadd.f32 0.0, %v1663
      %1665 = vmatmul.f32.gmra.mxu0 %v1566
      %v1666 = vpop.f32.mrf.mxu0
      %v1667 = vadd.f32 0.0, %v1666
      %1668 = vmatmul.f32.gmra.mxu0 %v1568
      %v1669 = vpop.f32.mrf.mxu0
      %v1670 = vadd.f32 0.0, %v1669
      %1671 = vmatmul.f32.gmra.mxu0 %v1570
      %v1672 = vpop.f32.mrf.mxu0
      %v1673 = vadd.f32 0.0, %v1672
      %1674 = vmatmul.f32.gmra.mxu0 %v1572
      %v1675 = vpop.f32.mrf.mxu0
      %v1676 = vadd.f32 0.0, %v1675
      %1677 = vmatmul.f32.gmra.mxu0 %v1574
      %v1678 = vpop.f32.mrf.mxu0
      %v1679 = vadd.f32 0.0, %v1678
      %1680 = vmatmul.f32.gmra.mxu0 %v1576
      %v1681 = vpop.f32.mrf.mxu0
      %v1682 = vadd.f32 0.0, %v1681
      %1683 = vmatmul.f32.gmra.mxu0 %v1578
      %v1684 = vpop.f32.mrf.mxu0
      %v1685 = vadd.f32 0.0, %v1684
      %1686 = vmatmul.f32.gmra.mxu0 %v1580
      %v1687 = vpop.f32.mrf.mxu0
      %v1688 = vadd.f32 0.0, %v1687
      %1689 = vmatmul.f32.gmra.mxu0 %v1582
      %v1690 = vpop.f32.mrf.mxu0
      %v1691 = vadd.f32 0.0, %v1690
      %1692 = vmatmul.f32.gmra.mxu0 %v1584
      %v1693 = vpop.f32.mrf.mxu0
      %v1694 = vadd.f32 0.0, %v1693
      %1695 = vmatmul.f32.gmra.mxu0 %v1586
      %v1696 = vpop.f32.mrf.mxu0
      %v1697 = vadd.f32 0.0, %v1696
      %1698 = vmatmul.f32.gmra.mxu0 %v1588
      %v1699 = vpop.f32.mrf.mxu0
      %v1700 = vadd.f32 0.0, %v1699
      %1701 = vmatmul.f32.gmra.mxu0 %v1590
      %v1702 = vpop.f32.mrf.mxu0
      %v1703 = vadd.f32 0.0, %v1702
      %1704 = vmatmul.f32.gmra.mxu0 %v1592
      %v1705 = vpop.f32.mrf.mxu0
      %v1706 = vadd.f32 0.0, %v1705
      %1707 = vmatmul.f32.gmra.mxu0 %v1594
      %v1708 = vpop.f32.mrf.mxu0
      %v1709 = vadd.f32 0.0, %v1708
      %1710 = vmatmul.f32.gmra.mxu0 %v1596
      %v1711 = vpop.f32.mrf.mxu0
      %v1712 = vadd.f32 0.0, %v1711
      %1713 = vdwg.mxu0
      %v1714 = vadd.f32 %v1403, %v1619
      %v1715 = vadd.f32 %v1404, %v1622
      %v1716 = vadd.f32 %v1405, %v1625
      %v1717 = vadd.f32 %v1406, %v1628
      %v1718 = vadd.f32 %v1407, %v1631
      %v1719 = vadd.f32 %v1408, %v1634
      %v1720 = vadd.f32 %v1409, %v1637
      %v1721 = vadd.f32 %v1410, %v1640
      %v1722 = vadd.f32 %v1411, %v1643
      %v1723 = vadd.f32 %v1412, %v1646
      %v1724 = vadd.f32 %v1413, %v1649
      %v1725 = vadd.f32 %v1414, %v1652
      %v1726 = vadd.f32 %v1415, %v1655
      %v1727 = vadd.f32 %v1416, %v1658
      %v1728 = vadd.f32 %v1417, %v1661
      %v1729 = vadd.f32 %v1418, %v1664
      %v1730 = vadd.f32 %v1419, %v1667
      %v1731 = vadd.f32 %v1420, %v1670
      %v1732 = vadd.f32 %v1421, %v1673
      %v1733 = vadd.f32 %v1422, %v1676
      %v1734 = vadd.f32 %v1423, %v1679
      %v1735 = vadd.f32 %v1424, %v1682
      %v1736 = vadd.f32 %v1425, %v1685
      %v1737 = vadd.f32 %v1426, %v1688
      %v1738 = vadd.f32 %v1427, %v1691
      %v1739 = vadd.f32 %v1428, %v1694
      %v1740 = vadd.f32 %v1429, %v1697
      %v1741 = vadd.f32 %v1430, %v1700
      %v1742 = vadd.f32 %v1431, %v1703
      %v1743 = vadd.f32 %v1432, %v1706
      %v1744 = vadd.f32 %v1433, %v1709
      %v1745 = vadd.f32 %v1434, %v1712
      %v1746 = vrot.slane %v1140, 2
      %v1747 = vrot.slane %v1141, 2
      %v1748 = vsel %vm792, %v1746, %v1747
      %v1749 = vrot.slane %v1142, 2
      %v1750 = vsel %vm792, %v1747, %v1749
      %v1751 = vrot.slane %v1143, 2
      %v1752 = vrot.slane %v1144, 2
      %v1753 = vsel %vm792, %v1751, %v1752
      %v1754 = vrot.slane %v1145, 2
      %v1755 = vsel %vm792, %v1752, %v1754
      %v1756 = vrot.slane %v1146, 2
      %v1757 = vrot.slane %v1147, 2
      %v1758 = vsel %vm792, %v1756, %v1757
      %v1759 = vrot.slane %v1148, 2
      %v1760 = vsel %vm792, %v1757, %v1759
      %v1761 = vrot.slane %v1149, 2
      %v1762 = vrot.slane %v1150, 2
      %v1763 = vsel %vm792, %v1761, %v1762
      %v1764 = vrot.slane %v1151, 2
      %v1765 = vsel %vm792, %v1762, %v1764
      %v1766 = vrot.slane %v1152, 2
      %v1767 = vrot.slane %v1153, 2
      %v1768 = vsel %vm792, %v1766, %v1767
      %v1769 = vrot.slane %v1154, 2
      %v1770 = vsel %vm792, %v1767, %v1769
      %v1771 = vrot.slane %v1155, 2
      %v1772 = vrot.slane %v1156, 2
      %v1773 = vsel %vm792, %v1771, %v1772
      %v1774 = vrot.slane %v1157, 2
      %v1775 = vsel %vm792, %v1772, %v1774
      %v1776 = vrot.slane %v1158, 2
      %v1777 = vrot.slane %v1159, 2
      %v1778 = vsel %vm792, %v1776, %v1777
      %v1779 = vrot.slane %v1160, 2
      %v1780 = vsel %vm792, %v1777, %v1779
      %v1781 = vrot.slane %v1161, 2
      %v1782 = vrot.slane %v1162, 2
      %v1783 = vsel %vm792, %v1781, %v1782
      %v1784 = vrot.slane %v1163, 2
      %v1785 = vsel %vm792, %v1782, %v1784
      %v1786 = vrot.slane %v1164, 2
      %v1787 = vrot.slane %v1165, 2
      %v1788 = vsel %vm792, %v1786, %v1787
      %v1789 = vrot.slane %v1166, 2
      %v1790 = vsel %vm792, %v1787, %v1789
      %v1791 = vrot.slane %v1167, 2
      %v1792 = vrot.slane %v1168, 2
      %v1793 = vsel %vm792, %v1791, %v1792
      %v1794 = vrot.slane %v1169, 2
      %v1795 = vsel %vm792, %v1792, %v1794
      %v1796 = vrot.slane %v1170, 2
      %v1797 = vrot.slane %v1171, 2
      %v1798 = vsel %vm792, %v1796, %v1797
      %v1799 = vrot.slane %v1172, 2
      %v1800 = vsel %vm792, %v1797, %v1799
      %v1801 = vrot.slane %v1173, 2
      %v1802 = vrot.slane %v1174, 2
      %v1803 = vsel %vm792, %v1801, %v1802
      %v1804 = vrot.slane %v1175, 2
      %v1805 = vsel %vm792, %v1802, %v1804
      %v1806 = vrot.slane %v1176, 2
      %v1807 = vrot.slane %v1177, 2
      %v1808 = vsel %vm792, %v1806, %v1807
      %v1809 = vrot.slane %v1178, 2
      %v1810 = vsel %vm792, %v1807, %v1809
      %v1811 = vrot.slane %v1179, 2
      %v1812 = vrot.slane %v1180, 2
      %v1813 = vsel %vm792, %v1811, %v1812
      %v1814 = vrot.slane %v1181, 2
      %v1815 = vsel %vm792, %v1812, %v1814
      %v1816 = vrot.slane %v1182, 2
      %v1817 = vrot.slane %v1183, 2
      %v1818 = vsel %vm792, %v1816, %v1817
      %v1819 = vrot.slane %v1184, 2
      %v1820 = vsel %vm792, %v1817, %v1819
      %v1821 = vrot.slane %v1185, 2
      %v1822 = vrot.slane %v1186, 2
      %v1823 = vsel %vm792, %v1821, %v1822
      %v1824 = vrot.slane %v1187, 2
      %v1825 = vsel %vm792, %v1822, %v1824
      %s1826 = scalar_lea.vmem %s1, 10
      %v1827 = vld [vmem:[%s1826] sm:$0x3]
      %v1828 = vunpack.c.l.bf16 %v1827
      %v1829 = vsel %vm430, %v1748, 0
      %v1831 = vsel %vm430, %v1750, 0
      %v1833 = vsel %vm430, %v1753, 0
      %v1835 = vsel %vm430, %v1755, 0
      %v1837 = vsel %vm430, %v1758, 0
      %v1839 = vsel %vm430, %v1760, 0
      %v1841 = vsel %vm430, %v1763, 0
      %v1843 = vsel %vm430, %v1765, 0
      %v1845 = vsel %vm430, %v1768, 0
      %v1847 = vsel %vm430, %v1770, 0
      %v1849 = vsel %vm430, %v1773, 0
      %v1851 = vsel %vm430, %v1775, 0
      %v1853 = vsel %vm430, %v1778, 0
      %v1855 = vsel %vm430, %v1780, 0
      %v1857 = vsel %vm430, %v1783, 0
      %v1859 = vsel %vm430, %v1785, 0
      %v1861 = vsel %vm430, %v1788, 0
      %v1863 = vsel %vm430, %v1790, 0
      %v1865 = vsel %vm430, %v1793, 0
      %v1867 = vsel %vm430, %v1795, 0
      %v1869 = vsel %vm430, %v1798, 0
      %v1871 = vsel %vm430, %v1800, 0
      %v1873 = vsel %vm430, %v1803, 0
      %v1875 = vsel %vm430, %v1805, 0
      %v1877 = vsel %vm430, %v1808, 0
      %v1879 = vsel %vm430, %v1810, 0
      %v1881 = vsel %vm430, %v1813, 0
      %v1883 = vsel %vm430, %v1815, 0
      %v1885 = vsel %vm430, %v1818, 0
      %v1887 = vsel %vm430, %v1820, 0
      %v1889 = vsel %vm430, %v1823, 0
      %v1891 = vsel %vm430, %v1825, 0
      %v1894 = vsel %vm495, %v1828, 0
      %1896 = vmatpush.msra.mxu0 0.0
      %1897 = vmatpush.msra.mxu0 0.0
      %1898 = vmatpush.msra.mxu0 0.0
      %1899 = vmatpush.msra.mxu0 0.0
      %1900 = vmatpush.msra.mxu0 0.0
      %1901 = vmatpush.msra.mxu0 0.0
      %1902 = vmatpush.msra.mxu0 0.0
      %1903 = vmatpush.msra.mxu0 0.0
      %1904 = vmatpush.msra.mxu0 0.0
      %1905 = vmatpush.msra.mxu0 0.0
      %1906 = vmatpush.msra.mxu0 0.0
      %1907 = vmatpush.msra.mxu0 0.0
      %1908 = vmatpush.msra.mxu0 0.0
      %1909 = vmatpush.msra.mxu0 0.0
      %1910 = vmatpush.msra.mxu0 0.0
      %1911 = vmatpush.msra.mxu0 %v1894
      %1912 = vmatmul.f32.gmra.mxu0 %v1829
      %v1913 = vpop.f32.mrf.mxu0
      %v1914 = vadd.f32 0.0, %v1913
      %1915 = vmatmul.f32.gmra.mxu0 %v1831
      %v1916 = vpop.f32.mrf.mxu0
      %v1917 = vadd.f32 0.0, %v1916
      %1918 = vmatmul.f32.gmra.mxu0 %v1833
      %v1919 = vpop.f32.mrf.mxu0
      %v1920 = vadd.f32 0.0, %v1919
      %1921 = vmatmul.f32.gmra.mxu0 %v1835
      %v1922 = vpop.f32.mrf.mxu0
      %v1923 = vadd.f32 0.0, %v1922
      %1924 = vmatmul.f32.gmra.mxu0 %v1837
      %v1925 = vpop.f32.mrf.mxu0
      %v1926 = vadd.f32 0.0, %v1925
      %1927 = vmatmul.f32.gmra.mxu0 %v1839
      %v1928 = vpop.f32.mrf.mxu0
      %v1929 = vadd.f32 0.0, %v1928
      %1930 = vmatmul.f32.gmra.mxu0 %v1841
      %v1931 = vpop.f32.mrf.mxu0
      %v1932 = vadd.f32 0.0, %v1931
      %1933 = vmatmul.f32.gmra.mxu0 %v1843
      %v1934 = vpop.f32.mrf.mxu0
      %v1935 = vadd.f32 0.0, %v1934
      %1936 = vmatmul.f32.gmra.mxu0 %v1845
      %v1937 = vpop.f32.mrf.mxu0
      %v1938 = vadd.f32 0.0, %v1937
      %1939 = vmatmul.f32.gmra.mxu0 %v1847
      %v1940 = vpop.f32.mrf.mxu0
      %v1941 = vadd.f32 0.0, %v1940
      %1942 = vmatmul.f32.gmra.mxu0 %v1849
      %v1943 = vpop.f32.mrf.mxu0
      %v1944 = vadd.f32 0.0, %v1943
      %1945 = vmatmul.f32.gmra.mxu0 %v1851
      %v1946 = vpop.f32.mrf.mxu0
      %v1947 = vadd.f32 0.0, %v1946
      %1948 = vmatmul.f32.gmra.mxu0 %v1853
      %v1949 = vpop.f32.mrf.mxu0
      %v1950 = vadd.f32 0.0, %v1949
      %1951 = vmatmul.f32.gmra.mxu0 %v1855
      %v1952 = vpop.f32.mrf.mxu0
      %v1953 = vadd.f32 0.0, %v1952
      %1954 = vmatmul.f32.gmra.mxu0 %v1857
      %v1955 = vpop.f32.mrf.mxu0
      %v1956 = vadd.f32 0.0, %v1955
      %1957 = vmatmul.f32.gmra.mxu0 %v1859
      %v1958 = vpop.f32.mrf.mxu0
      %v1959 = vadd.f32 0.0, %v1958
      %1960 = vmatmul.f32.gmra.mxu0 %v1861
      %v1961 = vpop.f32.mrf.mxu0
      %v1962 = vadd.f32 0.0, %v1961
      %1963 = vmatmul.f32.gmra.mxu0 %v1863
      %v1964 = vpop.f32.mrf.mxu0
      %v1965 = vadd.f32 0.0, %v1964
      %1966 = vmatmul.f32.gmra.mxu0 %v1865
      %v1967 = vpop.f32.mrf.mxu0
      %v1968 = vadd.f32 0.0, %v1967
      %1969 = vmatmul.f32.gmra.mxu0 %v1867
      %v1970 = vpop.f32.mrf.mxu0
      %v1971 = vadd.f32 0.0, %v1970
      %1972 = vmatmul.f32.gmra.mxu0 %v1869
      %v1973 = vpop.f32.mrf.mxu0
      %v1974 = vadd.f32 0.0, %v1973
      %1975 = vmatmul.f32.gmra.mxu0 %v1871
      %v1976 = vpop.f32.mrf.mxu0
      %v1977 = vadd.f32 0.0, %v1976
      %1978 = vmatmul.f32.gmra.mxu0 %v1873
      %v1979 = vpop.f32.mrf.mxu0
      %v1980 = vadd.f32 0.0, %v1979
      %1981 = vmatmul.f32.gmra.mxu0 %v1875
      %v1982 = vpop.f32.mrf.mxu0
      %v1983 = vadd.f32 0.0, %v1982
      %1984 = vmatmul.f32.gmra.mxu0 %v1877
      %v1985 = vpop.f32.mrf.mxu0
      %v1986 = vadd.f32 0.0, %v1985
      %1987 = vmatmul.f32.gmra.mxu0 %v1879
      %v1988 = vpop.f32.mrf.mxu0
      %v1989 = vadd.f32 0.0, %v1988
      %1990 = vmatmul.f32.gmra.mxu0 %v1881
      %v1991 = vpop.f32.mrf.mxu0
      %v1992 = vadd.f32 0.0, %v1991
      %1993 = vmatmul.f32.gmra.mxu0 %v1883
      %v1994 = vpop.f32.mrf.mxu0
      %v1995 = vadd.f32 0.0, %v1994
      %1996 = vmatmul.f32.gmra.mxu0 %v1885
      %v1997 = vpop.f32.mrf.mxu0
      %v1998 = vadd.f32 0.0, %v1997
      %1999 = vmatmul.f32.gmra.mxu0 %v1887
      %v2000 = vpop.f32.mrf.mxu0
      %v2001 = vadd.f32 0.0, %v2000
      %2002 = vmatmul.f32.gmra.mxu0 %v1889
      %v2003 = vpop.f32.mrf.mxu0
      %v2004 = vadd.f32 0.0, %v2003
      %2005 = vmatmul.f32.gmra.mxu0 %v1891
      %v2006 = vpop.f32.mrf.mxu0
      %v2007 = vadd.f32 0.0, %v2006
      %2008 = vdwg.mxu0
      %v2009 = vadd.f32 %v1714, %v1914
      %v2010 = vadd.f32 %v1715, %v1917
      %v2011 = vadd.f32 %v1716, %v1920
      %v2012 = vadd.f32 %v1717, %v1923
      %v2013 = vadd.f32 %v1718, %v1926
      %v2014 = vadd.f32 %v1719, %v1929
      %v2015 = vadd.f32 %v1720, %v1932
      %v2016 = vadd.f32 %v1721, %v1935
      %v2017 = vadd.f32 %v1722, %v1938
      %v2018 = vadd.f32 %v1723, %v1941
      %v2019 = vadd.f32 %v1724, %v1944
      %v2020 = vadd.f32 %v1725, %v1947
      %v2021 = vadd.f32 %v1726, %v1950
      %v2022 = vadd.f32 %v1727, %v1953
      %v2023 = vadd.f32 %v1728, %v1956
      %v2024 = vadd.f32 %v1729, %v1959
      %v2025 = vadd.f32 %v1730, %v1962
      %v2026 = vadd.f32 %v1731, %v1965
      %v2027 = vadd.f32 %v1732, %v1968
      %v2028 = vadd.f32 %v1733, %v1971
      %v2029 = vadd.f32 %v1734, %v1974
      %v2030 = vadd.f32 %v1735, %v1977
      %v2031 = vadd.f32 %v1736, %v1980
      %v2032 = vadd.f32 %v1737, %v1983
      %v2033 = vadd.f32 %v1738, %v1986
      %v2034 = vadd.f32 %v1739, %v1989
      %v2035 = vadd.f32 %v1740, %v1992
      %v2036 = vadd.f32 %v1741, %v1995
      %v2037 = vadd.f32 %v1742, %v1998
      %v2038 = vadd.f32 %v1743, %v2001
      %v2039 = vadd.f32 %v1744, %v2004
      %v2040 = vadd.f32 %v1745, %v2007
      %s2041 = sadd.s32 %s196, 2
      %s2042 = smul.u32 %s2041, 3
      %s2043 = smul.addr %s2042, 4
      %s2044 = scalar_lea.vmem %s184, %s2043
      %v2045 = vld [vmem:[%s2044] sm:$0xf]
      %v2046 = vld [vmem:[%s2044 + $0x4] sm:$0xf]
      %v2047 = vld [vmem:[%s2044 + $0x8] sm:$0x1]
      %v2048 = vld [vmem:[%s2044 + $0xc] sm:$0xf]
      %v2049 = vld [vmem:[%s2044 + $0x10] sm:$0xf]
      %v2050 = vld [vmem:[%s2044 + $0x14] sm:$0x1]
      %v2051 = vld [vmem:[%s2044 + $0x18] sm:$0xf]
      %v2052 = vld [vmem:[%s2044 + $0x1c] sm:$0xf]
      %v2053 = vld [vmem:[%s2044 + $0x20] sm:$0x1]
      %v2054 = vld [vmem:[%s2044 + $0x24] sm:$0xf]
      %v2055 = vld [vmem:[%s2044 + $0x28] sm:$0xf]
      %v2056 = vld [vmem:[%s2044 + $0x2c] sm:$0x1]
      %v2057 = vld [vmem:[%s2044 + $0x30] sm:$0xf]
      %v2058 = vld [vmem:[%s2044 + $0x34] sm:$0xf]
      %v2059 = vld [vmem:[%s2044 + $0x38] sm:$0x1]
      %v2060 = vld [vmem:[%s2044 + $0x3c] sm:$0xf]
      %v2061 = vld [vmem:[%s2044 + $0x40] sm:$0xf]
      %v2062 = vld [vmem:[%s2044 + $0x44] sm:$0x1]
      %v2063 = vld [vmem:[%s2044 + $0x48] sm:$0xf]
      %v2064 = vld [vmem:[%s2044 + $0x4c] sm:$0xf]
      %v2065 = vld [vmem:[%s2044 + $0x50] sm:$0x1]
      %v2066 = vld [vmem:[%s2044 + $0x54] sm:$0xf]
      %v2067 = vld [vmem:[%s2044 + $0x58] sm:$0xf]
      %v2068 = vld [vmem:[%s2044 + $0x5c] sm:$0x1]
      %v2069 = vld [vmem:[%s2044 + $0x60] sm:$0xf]
      %v2070 = vld [vmem:[%s2044 + $0x64] sm:$0xf]
      %v2071 = vld [vmem:[%s2044 + $0x68] sm:$0x1]
      %v2072 = vld [vmem:[%s2044 + $0x6c] sm:$0xf]
      %v2073 = vld [vmem:[%s2044 + $0x70] sm:$0xf]
      %v2074 = vld [vmem:[%s2044 + $0x74] sm:$0x1]
      %v2075 = vld [vmem:[%s2044 + $0x78] sm:$0xf]
      %v2076 = vld [vmem:[%s2044 + $0x7c] sm:$0xf]
      %v2077 = vld [vmem:[%s2044 + $0x80] sm:$0x1]
      %v2078 = vld [vmem:[%s2044 + $0x84] sm:$0xf]
      %v2079 = vld [vmem:[%s2044 + $0x88] sm:$0xf]
      %v2080 = vld [vmem:[%s2044 + $0x8c] sm:$0x1]
      %v2081 = vld [vmem:[%s2044 + $0x90] sm:$0xf]
      %v2082 = vld [vmem:[%s2044 + $0x94] sm:$0xf]
      %v2083 = vld [vmem:[%s2044 + $0x98] sm:$0x1]
      %v2084 = vld [vmem:[%s2044 + $0x9c] sm:$0xf]
      %v2085 = vld [vmem:[%s2044 + $0xa0] sm:$0xf]
      %v2086 = vld [vmem:[%s2044 + $0xa4] sm:$0x1]
      %v2087 = vld [vmem:[%s2044 + $0xa8] sm:$0xf]
      %v2088 = vld [vmem:[%s2044 + $0xac] sm:$0xf]
      %v2089 = vld [vmem:[%s2044 + $0xb0] sm:$0x1]
      %v2090 = vld [vmem:[%s2044 + $0xb4] sm:$0xf]
      %v2091 = vld [vmem:[%s2044 + $0xb8] sm:$0xf]
      %v2092 = vld [vmem:[%s2044 + $0xbc] sm:$0x1]
      %v2093 = vunpack.c.l.bf16 %v2045
      %v2094 = vunpack.c.l.bf16 %v2046
      %v2095 = vunpack.c.l.bf16 %v2047
      %v2096 = vunpack.c.l.bf16 %v2048
      %v2097 = vunpack.c.l.bf16 %v2049
      %v2098 = vunpack.c.l.bf16 %v2050
      %v2099 = vunpack.c.l.bf16 %v2051
      %v2100 = vunpack.c.l.bf16 %v2052
      %v2101 = vunpack.c.l.bf16 %v2053
      %v2102 = vunpack.c.l.bf16 %v2054
      %v2103 = vunpack.c.l.bf16 %v2055
      %v2104 = vunpack.c.l.bf16 %v2056
      %v2105 = vunpack.c.l.bf16 %v2057
      %v2106 = vunpack.c.l.bf16 %v2058
      %v2107 = vunpack.c.l.bf16 %v2059
      %v2108 = vunpack.c.l.bf16 %v2060
      %v2109 = vunpack.c.l.bf16 %v2061
      %v2110 = vunpack.c.l.bf16 %v2062
      %v2111 = vunpack.c.l.bf16 %v2063
      %v2112 = vunpack.c.l.bf16 %v2064
      %v2113 = vunpack.c.l.bf16 %v2065
      %v2114 = vunpack.c.l.bf16 %v2066
      %v2115 = vunpack.c.l.bf16 %v2067
      %v2116 = vunpack.c.l.bf16 %v2068
      %v2117 = vunpack.c.l.bf16 %v2069
      %v2118 = vunpack.c.l.bf16 %v2070
      %v2119 = vunpack.c.l.bf16 %v2071
      %v2120 = vunpack.c.l.bf16 %v2072
      %v2121 = vunpack.c.l.bf16 %v2073
      %v2122 = vunpack.c.l.bf16 %v2074
      %v2123 = vunpack.c.l.bf16 %v2075
      %v2124 = vunpack.c.l.bf16 %v2076
      %v2125 = vunpack.c.l.bf16 %v2077
      %v2126 = vunpack.c.l.bf16 %v2078
      %v2127 = vunpack.c.l.bf16 %v2079
      %v2128 = vunpack.c.l.bf16 %v2080
      %v2129 = vunpack.c.l.bf16 %v2081
      %v2130 = vunpack.c.l.bf16 %v2082
      %v2131 = vunpack.c.l.bf16 %v2083
      %v2132 = vunpack.c.l.bf16 %v2084
      %v2133 = vunpack.c.l.bf16 %v2085
      %v2134 = vunpack.c.l.bf16 %v2086
      %v2135 = vunpack.c.l.bf16 %v2087
      %v2136 = vunpack.c.l.bf16 %v2088
      %v2137 = vunpack.c.l.bf16 %v2089
      %v2138 = vunpack.c.l.bf16 %v2090
      %v2139 = vunpack.c.l.bf16 %v2091
      %v2140 = vunpack.c.l.bf16 %v2092
      %s2141 = scalar_lea.vmem %s1, 12
      %v2142 = vld [vmem:[%s2141] sm:$0x3]
      %v2143 = vunpack.c.l.bf16 %v2142
      %v2145 = vsel %vm430, %v2093, 0
      %v2148 = vsel %vm430, %v2094, 0
      %v2151 = vsel %vm430, %v2096, 0
      %v2154 = vsel %vm430, %v2097, 0
      %v2157 = vsel %vm430, %v2099, 0
      %v2160 = vsel %vm430, %v2100, 0
      %v2163 = vsel %vm430, %v2102, 0
      %v2166 = vsel %vm430, %v2103, 0
      %v2169 = vsel %vm430, %v2105, 0
      %v2172 = vsel %vm430, %v2106, 0
      %v2175 = vsel %vm430, %v2108, 0
      %v2178 = vsel %vm430, %v2109, 0
      %v2181 = vsel %vm430, %v2111, 0
      %v2184 = vsel %vm430, %v2112, 0
      %v2187 = vsel %vm430, %v2114, 0
      %v2190 = vsel %vm430, %v2115, 0
      %v2193 = vsel %vm430, %v2117, 0
      %v2196 = vsel %vm430, %v2118, 0
      %v2199 = vsel %vm430, %v2120, 0
      %v2202 = vsel %vm430, %v2121, 0
      %v2205 = vsel %vm430, %v2123, 0
      %v2208 = vsel %vm430, %v2124, 0
      %v2211 = vsel %vm430, %v2126, 0
      %v2214 = vsel %vm430, %v2127, 0
      %v2217 = vsel %vm430, %v2129, 0
      %v2220 = vsel %vm430, %v2130, 0
      %v2223 = vsel %vm430, %v2132, 0
      %v2226 = vsel %vm430, %v2133, 0
      %v2229 = vsel %vm430, %v2135, 0
      %v2232 = vsel %vm430, %v2136, 0
      %v2235 = vsel %vm430, %v2138, 0
      %v2238 = vsel %vm430, %v2139, 0
      %v2241 = vsel %vm495, %v2143, 0
      %2243 = vmatpush.msra.mxu0 0.0
      %2244 = vmatpush.msra.mxu0 0.0
      %2245 = vmatpush.msra.mxu0 0.0
      %2246 = vmatpush.msra.mxu0 0.0
      %2247 = vmatpush.msra.mxu0 0.0
      %2248 = vmatpush.msra.mxu0 0.0
      %2249 = vmatpush.msra.mxu0 0.0
      %2250 = vmatpush.msra.mxu0 0.0
      %2251 = vmatpush.msra.mxu0 0.0
      %2252 = vmatpush.msra.mxu0 0.0
      %2253 = vmatpush.msra.mxu0 0.0
      %2254 = vmatpush.msra.mxu0 0.0
      %2255 = vmatpush.msra.mxu0 0.0
      %2256 = vmatpush.msra.mxu0 0.0
      %2257 = vmatpush.msra.mxu0 0.0
      %2258 = vmatpush.msra.mxu0 %v2241
      %2259 = vmatmul.f32.gmra.mxu0 %v2145
      %v2260 = vpop.f32.mrf.mxu0
      %v2261 = vadd.f32 0.0, %v2260
      %2262 = vmatmul.f32.gmra.mxu0 %v2148
      %v2263 = vpop.f32.mrf.mxu0
      %v2264 = vadd.f32 0.0, %v2263
      %2265 = vmatmul.f32.gmra.mxu0 %v2151
      %v2266 = vpop.f32.mrf.mxu0
      %v2267 = vadd.f32 0.0, %v2266
      %2268 = vmatmul.f32.gmra.mxu0 %v2154
      %v2269 = vpop.f32.mrf.mxu0
      %v2270 = vadd.f32 0.0, %v2269
      %2271 = vmatmul.f32.gmra.mxu0 %v2157
      %v2272 = vpop.f32.mrf.mxu0
      %v2273 = vadd.f32 0.0, %v2272
      %2274 = vmatmul.f32.gmra.mxu0 %v2160
      %v2275 = vpop.f32.mrf.mxu0
      %v2276 = vadd.f32 0.0, %v2275
      %2277 = vmatmul.f32.gmra.mxu0 %v2163
      %v2278 = vpop.f32.mrf.mxu0
      %v2279 = vadd.f32 0.0, %v2278
      %2280 = vmatmul.f32.gmra.mxu0 %v2166
      %v2281 = vpop.f32.mrf.mxu0
      %v2282 = vadd.f32 0.0, %v2281
      %2283 = vmatmul.f32.gmra.mxu0 %v2169
      %v2284 = vpop.f32.mrf.mxu0
      %v2285 = vadd.f32 0.0, %v2284
      %2286 = vmatmul.f32.gmra.mxu0 %v2172
      %v2287 = vpop.f32.mrf.mxu0
      %v2288 = vadd.f32 0.0, %v2287
      %2289 = vmatmul.f32.gmra.mxu0 %v2175
      %v2290 = vpop.f32.mrf.mxu0
      %v2291 = vadd.f32 0.0, %v2290
      %2292 = vmatmul.f32.gmra.mxu0 %v2178
      %v2293 = vpop.f32.mrf.mxu0
      %v2294 = vadd.f32 0.0, %v2293
      %2295 = vmatmul.f32.gmra.mxu0 %v2181
      %v2296 = vpop.f32.mrf.mxu0
      %v2297 = vadd.f32 0.0, %v2296
      %2298 = vmatmul.f32.gmra.mxu0 %v2184
      %v2299 = vpop.f32.mrf.mxu0
      %v2300 = vadd.f32 0.0, %v2299
      %2301 = vmatmul.f32.gmra.mxu0 %v2187
      %v2302 = vpop.f32.mrf.mxu0
      %v2303 = vadd.f32 0.0, %v2302
      %2304 = vmatmul.f32.gmra.mxu0 %v2190
      %v2305 = vpop.f32.mrf.mxu0
      %v2306 = vadd.f32 0.0, %v2305
      %2307 = vmatmul.f32.gmra.mxu0 %v2193
      %v2308 = vpop.f32.mrf.mxu0
      %v2309 = vadd.f32 0.0, %v2308
      %2310 = vmatmul.f32.gmra.mxu0 %v2196
      %v2311 = vpop.f32.mrf.mxu0
      %v2312 = vadd.f32 0.0, %v2311
      %2313 = vmatmul.f32.gmra.mxu0 %v2199
      %v2314 = vpop.f32.mrf.mxu0
      %v2315 = vadd.f32 0.0, %v2314
      %2316 = vmatmul.f32.gmra.mxu0 %v2202
      %v2317 = vpop.f32.mrf.mxu0
      %v2318 = vadd.f32 0.0, %v2317
      %2319 = vmatmul.f32.gmra.mxu0 %v2205
      %v2320 = vpop.f32.mrf.mxu0
      %v2321 = vadd.f32 0.0, %v2320
      %2322 = vmatmul.f32.gmra.mxu0 %v2208
      %v2323 = vpop.f32.mrf.mxu0
      %v2324 = vadd.f32 0.0, %v2323
      %2325 = vmatmul.f32.gmra.mxu0 %v2211
      %v2326 = vpop.f32.mrf.mxu0
      %v2327 = vadd.f32 0.0, %v2326
      %2328 = vmatmul.f32.gmra.mxu0 %v2214
      %v2329 = vpop.f32.mrf.mxu0
      %v2330 = vadd.f32 0.0, %v2329
      %2331 = vmatmul.f32.gmra.mxu0 %v2217
      %v2332 = vpop.f32.mrf.mxu0
      %v2333 = vadd.f32 0.0, %v2332
      %2334 = vmatmul.f32.gmra.mxu0 %v2220
      %v2335 = vpop.f32.mrf.mxu0
      %v2336 = vadd.f32 0.0, %v2335
      %2337 = vmatmul.f32.gmra.mxu0 %v2223
      %v2338 = vpop.f32.mrf.mxu0
      %v2339 = vadd.f32 0.0, %v2338
      %2340 = vmatmul.f32.gmra.mxu0 %v2226
      %v2341 = vpop.f32.mrf.mxu0
      %v2342 = vadd.f32 0.0, %v2341
      %2343 = vmatmul.f32.gmra.mxu0 %v2229
      %v2344 = vpop.f32.mrf.mxu0
      %v2345 = vadd.f32 0.0, %v2344
      %2346 = vmatmul.f32.gmra.mxu0 %v2232
      %v2347 = vpop.f32.mrf.mxu0
      %v2348 = vadd.f32 0.0, %v2347
      %2349 = vmatmul.f32.gmra.mxu0 %v2235
      %v2350 = vpop.f32.mrf.mxu0
      %v2351 = vadd.f32 0.0, %v2350
      %2352 = vmatmul.f32.gmra.mxu0 %v2238
      %v2353 = vpop.f32.mrf.mxu0
      %v2354 = vadd.f32 0.0, %v2353
      %2355 = vdwg.mxu0
      %v2356 = vadd.f32 %v2009, %v2261
      %v2357 = vadd.f32 %v2010, %v2264
      %v2358 = vadd.f32 %v2011, %v2267
      %v2359 = vadd.f32 %v2012, %v2270
      %v2360 = vadd.f32 %v2013, %v2273
      %v2361 = vadd.f32 %v2014, %v2276
      %v2362 = vadd.f32 %v2015, %v2279
      %v2363 = vadd.f32 %v2016, %v2282
      %v2364 = vadd.f32 %v2017, %v2285
      %v2365 = vadd.f32 %v2018, %v2288
      %v2366 = vadd.f32 %v2019, %v2291
      %v2367 = vadd.f32 %v2020, %v2294
      %v2368 = vadd.f32 %v2021, %v2297
      %v2369 = vadd.f32 %v2022, %v2300
      %v2370 = vadd.f32 %v2023, %v2303
      %v2371 = vadd.f32 %v2024, %v2306
      %v2372 = vadd.f32 %v2025, %v2309
      %v2373 = vadd.f32 %v2026, %v2312
      %v2374 = vadd.f32 %v2027, %v2315
      %v2375 = vadd.f32 %v2028, %v2318
      %v2376 = vadd.f32 %v2029, %v2321
      %v2377 = vadd.f32 %v2030, %v2324
      %v2378 = vadd.f32 %v2031, %v2327
      %v2379 = vadd.f32 %v2032, %v2330
      %v2380 = vadd.f32 %v2033, %v2333
      %v2381 = vadd.f32 %v2034, %v2336
      %v2382 = vadd.f32 %v2035, %v2339
      %v2383 = vadd.f32 %v2036, %v2342
      %v2384 = vadd.f32 %v2037, %v2345
      %v2385 = vadd.f32 %v2038, %v2348
      %v2386 = vadd.f32 %v2039, %v2351
      %v2387 = vadd.f32 %v2040, %v2354
      %v2404 = vrot.slane %v2093, 1
      %v2405 = vrot.slane %v2094, 1
      %v2406 = vsel %vm346, %v2404, %v2405
      %v2407 = vrot.slane %v2095, 1
      %v2408 = vsel %vm346, %v2405, %v2407
      %v2409 = vrot.slane %v2096, 1
      %v2410 = vrot.slane %v2097, 1
      %v2411 = vsel %vm346, %v2409, %v2410
      %v2412 = vrot.slane %v2098, 1
      %v2413 = vsel %vm346, %v2410, %v2412
      %v2414 = vrot.slane %v2099, 1
      %v2415 = vrot.slane %v2100, 1
      %v2416 = vsel %vm346, %v2414, %v2415
      %v2417 = vrot.slane %v2101, 1
      %v2418 = vsel %vm346, %v2415, %v2417
      %v2419 = vrot.slane %v2102, 1
      %v2420 = vrot.slane %v2103, 1
      %v2421 = vsel %vm346, %v2419, %v2420
      %v2422 = vrot.slane %v2104, 1
      %v2423 = vsel %vm346, %v2420, %v2422
      %v2424 = vrot.slane %v2105, 1
      %v2425 = vrot.slane %v2106, 1
      %v2426 = vsel %vm346, %v2424, %v2425
      %v2427 = vrot.slane %v2107, 1
      %v2428 = vsel %vm346, %v2425, %v2427
      %v2429 = vrot.slane %v2108, 1
      %v2430 = vrot.slane %v2109, 1
      %v2431 = vsel %vm346, %v2429, %v2430
      %v2432 = vrot.slane %v2110, 1
      %v2433 = vsel %vm346, %v2430, %v2432
      %v2434 = vrot.slane %v2111, 1
      %v2435 = vrot.slane %v2112, 1
      %v2436 = vsel %vm346, %v2434, %v2435
      %v2437 = vrot.slane %v2113, 1
      %v2438 = vsel %vm346, %v2435, %v2437
      %v2439 = vrot.slane %v2114, 1
      %v2440 = vrot.slane %v2115, 1
      %v2441 = vsel %vm346, %v2439, %v2440
      %v2442 = vrot.slane %v2116, 1
      %v2443 = vsel %vm346, %v2440, %v2442
      %v2444 = vrot.slane %v2117, 1
      %v2445 = vrot.slane %v2118, 1
      %v2446 = vsel %vm346, %v2444, %v2445
      %v2447 = vrot.slane %v2119, 1
      %v2448 = vsel %vm346, %v2445, %v2447
      %v2449 = vrot.slane %v2120, 1
      %v2450 = vrot.slane %v2121, 1
      %v2451 = vsel %vm346, %v2449, %v2450
      %v2452 = vrot.slane %v2122, 1
      %v2453 = vsel %vm346, %v2450, %v2452
      %v2454 = vrot.slane %v2123, 1
      %v2455 = vrot.slane %v2124, 1
      %v2456 = vsel %vm346, %v2454, %v2455
      %v2457 = vrot.slane %v2125, 1
      %v2458 = vsel %vm346, %v2455, %v2457
      %v2459 = vrot.slane %v2126, 1
      %v2460 = vrot.slane %v2127, 1
      %v2461 = vsel %vm346, %v2459, %v2460
      %v2462 = vrot.slane %v2128, 1
      %v2463 = vsel %vm346, %v2460, %v2462
      %v2464 = vrot.slane %v2129, 1
      %v2465 = vrot.slane %v2130, 1
      %v2466 = vsel %vm346, %v2464, %v2465
      %v2467 = vrot.slane %v2131, 1
      %v2468 = vsel %vm346, %v2465, %v2467
      %v2469 = vrot.slane %v2132, 1
      %v2470 = vrot.slane %v2133, 1
      %v2471 = vsel %vm346, %v2469, %v2470
      %v2472 = vrot.slane %v2134, 1
      %v2473 = vsel %vm346, %v2470, %v2472
      %v2474 = vrot.slane %v2135, 1
      %v2475 = vrot.slane %v2136, 1
      %v2476 = vsel %vm346, %v2474, %v2475
      %v2477 = vrot.slane %v2137, 1
      %v2478 = vsel %vm346, %v2475, %v2477
      %v2479 = vrot.slane %v2138, 1
      %v2480 = vrot.slane %v2139, 1
      %v2481 = vsel %vm346, %v2479, %v2480
      %v2482 = vrot.slane %v2140, 1
      %v2483 = vsel %vm346, %v2480, %v2482
      %s2484 = scalar_lea.vmem %s1, 14
      %v2485 = vld [vmem:[%s2484] sm:$0x3]
      %v2486 = vunpack.c.l.bf16 %v2485
      %v2487 = vsel %vm430, %v2406, 0
      %v2489 = vsel %vm430, %v2408, 0
      %v2491 = vsel %vm430, %v2411, 0
      %v2493 = vsel %vm430, %v2413, 0
      %v2495 = vsel %vm430, %v2416, 0
      %v2497 = vsel %vm430, %v2418, 0
      %v2499 = vsel %vm430, %v2421, 0
      %v2501 = vsel %vm430, %v2423, 0
      %v2503 = vsel %vm430, %v2426, 0
      %v2505 = vsel %vm430, %v2428, 0
      %v2507 = vsel %vm430, %v2431, 0
      %v2509 = vsel %vm430, %v2433, 0
      %v2511 = vsel %vm430, %v2436, 0
      %v2513 = vsel %vm430, %v2438, 0
      %v2515 = vsel %vm430, %v2441, 0
      %v2517 = vsel %vm430, %v2443, 0
      %v2519 = vsel %vm430, %v2446, 0
      %v2521 = vsel %vm430, %v2448, 0
      %v2523 = vsel %vm430, %v2451, 0
      %v2525 = vsel %vm430, %v2453, 0
      %v2527 = vsel %vm430, %v2456, 0
      %v2529 = vsel %vm430, %v2458, 0
      %v2531 = vsel %vm430, %v2461, 0
      %v2533 = vsel %vm430, %v2463, 0
      %v2535 = vsel %vm430, %v2466, 0
      %v2537 = vsel %vm430, %v2468, 0
      %v2539 = vsel %vm430, %v2471, 0
      %v2541 = vsel %vm430, %v2473, 0
      %v2543 = vsel %vm430, %v2476, 0
      %v2545 = vsel %vm430, %v2478, 0
      %v2547 = vsel %vm430, %v2481, 0
      %v2549 = vsel %vm430, %v2483, 0
      %v2552 = vsel %vm495, %v2486, 0
      %2554 = vmatpush.msra.mxu0 0.0
      %2555 = vmatpush.msra.mxu0 0.0
      %2556 = vmatpush.msra.mxu0 0.0
      %2557 = vmatpush.msra.mxu0 0.0
      %2558 = vmatpush.msra.mxu0 0.0
      %2559 = vmatpush.msra.mxu0 0.0
      %2560 = vmatpush.msra.mxu0 0.0
      %2561 = vmatpush.msra.mxu0 0.0
      %2562 = vmatpush.msra.mxu0 0.0
      %2563 = vmatpush.msra.mxu0 0.0
      %2564 = vmatpush.msra.mxu0 0.0
      %2565 = vmatpush.msra.mxu0 0.0
      %2566 = vmatpush.msra.mxu0 0.0
      %2567 = vmatpush.msra.mxu0 0.0
      %2568 = vmatpush.msra.mxu0 0.0
      %2569 = vmatpush.msra.mxu0 %v2552
      %2570 = vmatmul.f32.gmra.mxu0 %v2487
      %v2571 = vpop.f32.mrf.mxu0
      %v2572 = vadd.f32 0.0, %v2571
      %2573 = vmatmul.f32.gmra.mxu0 %v2489
      %v2574 = vpop.f32.mrf.mxu0
      %v2575 = vadd.f32 0.0, %v2574
      %2576 = vmatmul.f32.gmra.mxu0 %v2491
      %v2577 = vpop.f32.mrf.mxu0
      %v2578 = vadd.f32 0.0, %v2577
      %2579 = vmatmul.f32.gmra.mxu0 %v2493
      %v2580 = vpop.f32.mrf.mxu0
      %v2581 = vadd.f32 0.0, %v2580
      %2582 = vmatmul.f32.gmra.mxu0 %v2495
      %v2583 = vpop.f32.mrf.mxu0
      %v2584 = vadd.f32 0.0, %v2583
      %2585 = vmatmul.f32.gmra.mxu0 %v2497
      %v2586 = vpop.f32.mrf.mxu0
      %v2587 = vadd.f32 0.0, %v2586
      %2588 = vmatmul.f32.gmra.mxu0 %v2499
      %v2589 = vpop.f32.mrf.mxu0
      %v2590 = vadd.f32 0.0, %v2589
      %2591 = vmatmul.f32.gmra.mxu0 %v2501
      %v2592 = vpop.f32.mrf.mxu0
      %v2593 = vadd.f32 0.0, %v2592
      %2594 = vmatmul.f32.gmra.mxu0 %v2503
      %v2595 = vpop.f32.mrf.mxu0
      %v2596 = vadd.f32 0.0, %v2595
      %2597 = vmatmul.f32.gmra.mxu0 %v2505
      %v2598 = vpop.f32.mrf.mxu0
      %v2599 = vadd.f32 0.0, %v2598
      %2600 = vmatmul.f32.gmra.mxu0 %v2507
      %v2601 = vpop.f32.mrf.mxu0
      %v2602 = vadd.f32 0.0, %v2601
      %2603 = vmatmul.f32.gmra.mxu0 %v2509
      %v2604 = vpop.f32.mrf.mxu0
      %v2605 = vadd.f32 0.0, %v2604
      %2606 = vmatmul.f32.gmra.mxu0 %v2511
      %v2607 = vpop.f32.mrf.mxu0
      %v2608 = vadd.f32 0.0, %v2607
      %2609 = vmatmul.f32.gmra.mxu0 %v2513
      %v2610 = vpop.f32.mrf.mxu0
      %v2611 = vadd.f32 0.0, %v2610
      %2612 = vmatmul.f32.gmra.mxu0 %v2515
      %v2613 = vpop.f32.mrf.mxu0
      %v2614 = vadd.f32 0.0, %v2613
      %2615 = vmatmul.f32.gmra.mxu0 %v2517
      %v2616 = vpop.f32.mrf.mxu0
      %v2617 = vadd.f32 0.0, %v2616
      %2618 = vmatmul.f32.gmra.mxu0 %v2519
      %v2619 = vpop.f32.mrf.mxu0
      %v2620 = vadd.f32 0.0, %v2619
      %2621 = vmatmul.f32.gmra.mxu0 %v2521
      %v2622 = vpop.f32.mrf.mxu0
      %v2623 = vadd.f32 0.0, %v2622
      %2624 = vmatmul.f32.gmra.mxu0 %v2523
      %v2625 = vpop.f32.mrf.mxu0
      %v2626 = vadd.f32 0.0, %v2625
      %2627 = vmatmul.f32.gmra.mxu0 %v2525
      %v2628 = vpop.f32.mrf.mxu0
      %v2629 = vadd.f32 0.0, %v2628
      %2630 = vmatmul.f32.gmra.mxu0 %v2527
      %v2631 = vpop.f32.mrf.mxu0
      %v2632 = vadd.f32 0.0, %v2631
      %2633 = vmatmul.f32.gmra.mxu0 %v2529
      %v2634 = vpop.f32.mrf.mxu0
      %v2635 = vadd.f32 0.0, %v2634
      %2636 = vmatmul.f32.gmra.mxu0 %v2531
      %v2637 = vpop.f32.mrf.mxu0
      %v2638 = vadd.f32 0.0, %v2637
      %2639 = vmatmul.f32.gmra.mxu0 %v2533
      %v2640 = vpop.f32.mrf.mxu0
      %v2641 = vadd.f32 0.0, %v2640
      %2642 = vmatmul.f32.gmra.mxu0 %v2535
      %v2643 = vpop.f32.mrf.mxu0
      %v2644 = vadd.f32 0.0, %v2643
      %2645 = vmatmul.f32.gmra.mxu0 %v2537
      %v2646 = vpop.f32.mrf.mxu0
      %v2647 = vadd.f32 0.0, %v2646
      %2648 = vmatmul.f32.gmra.mxu0 %v2539
      %v2649 = vpop.f32.mrf.mxu0
      %v2650 = vadd.f32 0.0, %v2649
      %2651 = vmatmul.f32.gmra.mxu0 %v2541
      %v2652 = vpop.f32.mrf.mxu0
      %v2653 = vadd.f32 0.0, %v2652
      %2654 = vmatmul.f32.gmra.mxu0 %v2543
      %v2655 = vpop.f32.mrf.mxu0
      %v2656 = vadd.f32 0.0, %v2655
      %2657 = vmatmul.f32.gmra.mxu0 %v2545
      %v2658 = vpop.f32.mrf.mxu0
      %v2659 = vadd.f32 0.0, %v2658
      %2660 = vmatmul.f32.gmra.mxu0 %v2547
      %v2661 = vpop.f32.mrf.mxu0
      %v2662 = vadd.f32 0.0, %v2661
      %2663 = vmatmul.f32.gmra.mxu0 %v2549
      %v2664 = vpop.f32.mrf.mxu0
      %v2665 = vadd.f32 0.0, %v2664
      %2666 = vdwg.mxu0
      %v2667 = vadd.f32 %v2356, %v2572
      %v2668 = vadd.f32 %v2357, %v2575
      %v2669 = vadd.f32 %v2358, %v2578
      %v2670 = vadd.f32 %v2359, %v2581
      %v2671 = vadd.f32 %v2360, %v2584
      %v2672 = vadd.f32 %v2361, %v2587
      %v2673 = vadd.f32 %v2362, %v2590
      %v2674 = vadd.f32 %v2363, %v2593
      %v2675 = vadd.f32 %v2364, %v2596
      %v2676 = vadd.f32 %v2365, %v2599
      %v2677 = vadd.f32 %v2366, %v2602
      %v2678 = vadd.f32 %v2367, %v2605
      %v2679 = vadd.f32 %v2368, %v2608
      %v2680 = vadd.f32 %v2369, %v2611
      %v2681 = vadd.f32 %v2370, %v2614
      %v2682 = vadd.f32 %v2371, %v2617
      %v2683 = vadd.f32 %v2372, %v2620
      %v2684 = vadd.f32 %v2373, %v2623
      %v2685 = vadd.f32 %v2374, %v2626
      %v2686 = vadd.f32 %v2375, %v2629
      %v2687 = vadd.f32 %v2376, %v2632
      %v2688 = vadd.f32 %v2377, %v2635
      %v2689 = vadd.f32 %v2378, %v2638
      %v2690 = vadd.f32 %v2379, %v2641
      %v2691 = vadd.f32 %v2380, %v2644
      %v2692 = vadd.f32 %v2381, %v2647
      %v2693 = vadd.f32 %v2382, %v2650
      %v2694 = vadd.f32 %v2383, %v2653
      %v2695 = vadd.f32 %v2384, %v2656
      %v2696 = vadd.f32 %v2385, %v2659
      %v2697 = vadd.f32 %v2386, %v2662
      %v2698 = vadd.f32 %v2387, %v2665
      %v2699 = vrot.slane %v2093, 2
      %v2700 = vrot.slane %v2094, 2
      %v2701 = vsel %vm792, %v2699, %v2700
      %v2702 = vrot.slane %v2095, 2
      %v2703 = vsel %vm792, %v2700, %v2702
      %v2704 = vrot.slane %v2096, 2
      %v2705 = vrot.slane %v2097, 2
      %v2706 = vsel %vm792, %v2704, %v2705
      %v2707 = vrot.slane %v2098, 2
      %v2708 = vsel %vm792, %v2705, %v2707
      %v2709 = vrot.slane %v2099, 2
      %v2710 = vrot.slane %v2100, 2
      %v2711 = vsel %vm792, %v2709, %v2710
      %v2712 = vrot.slane %v2101, 2
      %v2713 = vsel %vm792, %v2710, %v2712
      %v2714 = vrot.slane %v2102, 2
      %v2715 = vrot.slane %v2103, 2
      %v2716 = vsel %vm792, %v2714, %v2715
      %v2717 = vrot.slane %v2104, 2
      %v2718 = vsel %vm792, %v2715, %v2717
      %v2719 = vrot.slane %v2105, 2
      %v2720 = vrot.slane %v2106, 2
      %v2721 = vsel %vm792, %v2719, %v2720
      %v2722 = vrot.slane %v2107, 2
      %v2723 = vsel %vm792, %v2720, %v2722
      %v2724 = vrot.slane %v2108, 2
      %v2725 = vrot.slane %v2109, 2
      %v2726 = vsel %vm792, %v2724, %v2725
      %v2727 = vrot.slane %v2110, 2
      %v2728 = vsel %vm792, %v2725, %v2727
      %v2729 = vrot.slane %v2111, 2
      %v2730 = vrot.slane %v2112, 2
      %v2731 = vsel %vm792, %v2729, %v2730
      %v2732 = vrot.slane %v2113, 2
      %v2733 = vsel %vm792, %v2730, %v2732
      %v2734 = vrot.slane %v2114, 2
      %v2735 = vrot.slane %v2115, 2
      %v2736 = vsel %vm792, %v2734, %v2735
      %v2737 = vrot.slane %v2116, 2
      %v2738 = vsel %vm792, %v2735, %v2737
      %v2739 = vrot.slane %v2117, 2
      %v2740 = vrot.slane %v2118, 2
      %v2741 = vsel %vm792, %v2739, %v2740
      %v2742 = vrot.slane %v2119, 2
      %v2743 = vsel %vm792, %v2740, %v2742
      %v2744 = vrot.slane %v2120, 2
      %v2745 = vrot.slane %v2121, 2
      %v2746 = vsel %vm792, %v2744, %v2745
      %v2747 = vrot.slane %v2122, 2
      %v2748 = vsel %vm792, %v2745, %v2747
      %v2749 = vrot.slane %v2123, 2
      %v2750 = vrot.slane %v2124, 2
      %v2751 = vsel %vm792, %v2749, %v2750
      %v2752 = vrot.slane %v2125, 2
      %v2753 = vsel %vm792, %v2750, %v2752
      %v2754 = vrot.slane %v2126, 2
      %v2755 = vrot.slane %v2127, 2
      %v2756 = vsel %vm792, %v2754, %v2755
      %v2757 = vrot.slane %v2128, 2
      %v2758 = vsel %vm792, %v2755, %v2757
      %v2759 = vrot.slane %v2129, 2
      %v2760 = vrot.slane %v2130, 2
      %v2761 = vsel %vm792, %v2759, %v2760
      %v2762 = vrot.slane %v2131, 2
      %v2763 = vsel %vm792, %v2760, %v2762
      %v2764 = vrot.slane %v2132, 2
      %v2765 = vrot.slane %v2133, 2
      %v2766 = vsel %vm792, %v2764, %v2765
      %v2767 = vrot.slane %v2134, 2
      %v2768 = vsel %vm792, %v2765, %v2767
      %v2769 = vrot.slane %v2135, 2
      %v2770 = vrot.slane %v2136, 2
      %v2771 = vsel %vm792, %v2769, %v2770
      %v2772 = vrot.slane %v2137, 2
      %v2773 = vsel %vm792, %v2770, %v2772
      %v2774 = vrot.slane %v2138, 2
      %v2775 = vrot.slane %v2139, 2
      %v2776 = vsel %vm792, %v2774, %v2775
      %v2777 = vrot.slane %v2140, 2
      %v2778 = vsel %vm792, %v2775, %v2777
      %s2779 = scalar_lea.vmem %s1, 16
      %v2780 = vld [vmem:[%s2779] sm:$0x3]
      %v2781 = vunpack.c.l.bf16 %v2780
      %v2782 = vsel %vm430, %v2701, 0
      %v2784 = vsel %vm430, %v2703, 0
      %v2786 = vsel %vm430, %v2706, 0
      %v2788 = vsel %vm430, %v2708, 0
      %v2790 = vsel %vm430, %v2711, 0
      %v2792 = vsel %vm430, %v2713, 0
      %v2794 = vsel %vm430, %v2716, 0
      %v2796 = vsel %vm430, %v2718, 0
      %v2798 = vsel %vm430, %v2721, 0
      %v2800 = vsel %vm430, %v2723, 0
      %v2802 = vsel %vm430, %v2726, 0
      %v2804 = vsel %vm430, %v2728, 0
      %v2806 = vsel %vm430, %v2731, 0
      %v2808 = vsel %vm430, %v2733, 0
      %v2810 = vsel %vm430, %v2736, 0
      %v2812 = vsel %vm430, %v2738, 0
      %v2814 = vsel %vm430, %v2741, 0
      %v2816 = vsel %vm430, %v2743, 0
      %v2818 = vsel %vm430, %v2746, 0
      %v2820 = vsel %vm430, %v2748, 0
      %v2822 = vsel %vm430, %v2751, 0
      %v2824 = vsel %vm430, %v2753, 0
      %v2826 = vsel %vm430, %v2756, 0
      %v2828 = vsel %vm430, %v2758, 0
      %v2830 = vsel %vm430, %v2761, 0
      %v2832 = vsel %vm430, %v2763, 0
      %v2834 = vsel %vm430, %v2766, 0
      %v2836 = vsel %vm430, %v2768, 0
      %v2838 = vsel %vm430, %v2771, 0
      %v2840 = vsel %vm430, %v2773, 0
      %v2842 = vsel %vm430, %v2776, 0
      %v2844 = vsel %vm430, %v2778, 0
      %v2847 = vsel %vm495, %v2781, 0
      %2849 = vmatpush.msra.mxu0 0.0
      %2850 = vmatpush.msra.mxu0 0.0
      %2851 = vmatpush.msra.mxu0 0.0
      %2852 = vmatpush.msra.mxu0 0.0
      %2853 = vmatpush.msra.mxu0 0.0
      %2854 = vmatpush.msra.mxu0 0.0
      %2855 = vmatpush.msra.mxu0 0.0
      %2856 = vmatpush.msra.mxu0 0.0
      %2857 = vmatpush.msra.mxu0 0.0
      %2858 = vmatpush.msra.mxu0 0.0
      %2859 = vmatpush.msra.mxu0 0.0
      %2860 = vmatpush.msra.mxu0 0.0
      %2861 = vmatpush.msra.mxu0 0.0
      %2862 = vmatpush.msra.mxu0 0.0
      %2863 = vmatpush.msra.mxu0 0.0
      %2864 = vmatpush.msra.mxu0 %v2847
      %2865 = vmatmul.f32.gmra.mxu0 %v2782
      %v2866 = vpop.f32.mrf.mxu0
      %v2867 = vadd.f32 0.0, %v2866
      %2868 = vmatmul.f32.gmra.mxu0 %v2784
      %v2869 = vpop.f32.mrf.mxu0
      %v2870 = vadd.f32 0.0, %v2869
      %2871 = vmatmul.f32.gmra.mxu0 %v2786
      %v2872 = vpop.f32.mrf.mxu0
      %v2873 = vadd.f32 0.0, %v2872
      %2874 = vmatmul.f32.gmra.mxu0 %v2788
      %v2875 = vpop.f32.mrf.mxu0
      %v2876 = vadd.f32 0.0, %v2875
      %2877 = vmatmul.f32.gmra.mxu0 %v2790
      %v2878 = vpop.f32.mrf.mxu0
      %v2879 = vadd.f32 0.0, %v2878
      %2880 = vmatmul.f32.gmra.mxu0 %v2792
      %v2881 = vpop.f32.mrf.mxu0
      %v2882 = vadd.f32 0.0, %v2881
      %2883 = vmatmul.f32.gmra.mxu0 %v2794
      %v2884 = vpop.f32.mrf.mxu0
      %v2885 = vadd.f32 0.0, %v2884
      %2886 = vmatmul.f32.gmra.mxu0 %v2796
      %v2887 = vpop.f32.mrf.mxu0
      %v2888 = vadd.f32 0.0, %v2887
      %2889 = vmatmul.f32.gmra.mxu0 %v2798
      %v2890 = vpop.f32.mrf.mxu0
      %v2891 = vadd.f32 0.0, %v2890
      %2892 = vmatmul.f32.gmra.mxu0 %v2800
      %v2893 = vpop.f32.mrf.mxu0
      %v2894 = vadd.f32 0.0, %v2893
      %2895 = vmatmul.f32.gmra.mxu0 %v2802
      %v2896 = vpop.f32.mrf.mxu0
      %v2897 = vadd.f32 0.0, %v2896
      %2898 = vmatmul.f32.gmra.mxu0 %v2804
      %v2899 = vpop.f32.mrf.mxu0
      %v2900 = vadd.f32 0.0, %v2899
      %2901 = vmatmul.f32.gmra.mxu0 %v2806
      %v2902 = vpop.f32.mrf.mxu0
      %v2903 = vadd.f32 0.0, %v2902
      %2904 = vmatmul.f32.gmra.mxu0 %v2808
      %v2905 = vpop.f32.mrf.mxu0
      %v2906 = vadd.f32 0.0, %v2905
      %2907 = vmatmul.f32.gmra.mxu0 %v2810
      %v2908 = vpop.f32.mrf.mxu0
      %v2909 = vadd.f32 0.0, %v2908
      %2910 = vmatmul.f32.gmra.mxu0 %v2812
      %v2911 = vpop.f32.mrf.mxu0
      %v2912 = vadd.f32 0.0, %v2911
      %2913 = vmatmul.f32.gmra.mxu0 %v2814
      %v2914 = vpop.f32.mrf.mxu0
      %v2915 = vadd.f32 0.0, %v2914
      %2916 = vmatmul.f32.gmra.mxu0 %v2816
      %v2917 = vpop.f32.mrf.mxu0
      %v2918 = vadd.f32 0.0, %v2917
      %2919 = vmatmul.f32.gmra.mxu0 %v2818
      %v2920 = vpop.f32.mrf.mxu0
      %v2921 = vadd.f32 0.0, %v2920
      %2922 = vmatmul.f32.gmra.mxu0 %v2820
      %v2923 = vpop.f32.mrf.mxu0
      %v2924 = vadd.f32 0.0, %v2923
      %2925 = vmatmul.f32.gmra.mxu0 %v2822
      %v2926 = vpop.f32.mrf.mxu0
      %v2927 = vadd.f32 0.0, %v2926
      %2928 = vmatmul.f32.gmra.mxu0 %v2824
      %v2929 = vpop.f32.mrf.mxu0
      %v2930 = vadd.f32 0.0, %v2929
      %2931 = vmatmul.f32.gmra.mxu0 %v2826
      %v2932 = vpop.f32.mrf.mxu0
      %v2933 = vadd.f32 0.0, %v2932
      %2934 = vmatmul.f32.gmra.mxu0 %v2828
      %v2935 = vpop.f32.mrf.mxu0
      %v2936 = vadd.f32 0.0, %v2935
      %2937 = vmatmul.f32.gmra.mxu0 %v2830
      %v2938 = vpop.f32.mrf.mxu0
      %v2939 = vadd.f32 0.0, %v2938
      %2940 = vmatmul.f32.gmra.mxu0 %v2832
      %v2941 = vpop.f32.mrf.mxu0
      %v2942 = vadd.f32 0.0, %v2941
      %2943 = vmatmul.f32.gmra.mxu0 %v2834
      %v2944 = vpop.f32.mrf.mxu0
      %v2945 = vadd.f32 0.0, %v2944
      %2946 = vmatmul.f32.gmra.mxu0 %v2836
      %v2947 = vpop.f32.mrf.mxu0
      %v2948 = vadd.f32 0.0, %v2947
      %2949 = vmatmul.f32.gmra.mxu0 %v2838
      %v2950 = vpop.f32.mrf.mxu0
      %v2951 = vadd.f32 0.0, %v2950
      %2952 = vmatmul.f32.gmra.mxu0 %v2840
      %v2953 = vpop.f32.mrf.mxu0
      %v2954 = vadd.f32 0.0, %v2953
      %2955 = vmatmul.f32.gmra.mxu0 %v2842
      %v2956 = vpop.f32.mrf.mxu0
      %v2957 = vadd.f32 0.0, %v2956
      %2958 = vmatmul.f32.gmra.mxu0 %v2844
      %v2959 = vpop.f32.mrf.mxu0
      %v2960 = vadd.f32 0.0, %v2959
      %2961 = vdwg.mxu0
      %v2962 = vadd.f32 %v2667, %v2867
      %v2963 = vadd.f32 %v2668, %v2870
      %v2964 = vadd.f32 %v2669, %v2873
      %v2965 = vadd.f32 %v2670, %v2876
      %v2966 = vadd.f32 %v2671, %v2879
      %v2967 = vadd.f32 %v2672, %v2882
      %v2968 = vadd.f32 %v2673, %v2885
      %v2969 = vadd.f32 %v2674, %v2888
      %v2970 = vadd.f32 %v2675, %v2891
      %v2971 = vadd.f32 %v2676, %v2894
      %v2972 = vadd.f32 %v2677, %v2897
      %v2973 = vadd.f32 %v2678, %v2900
      %v2974 = vadd.f32 %v2679, %v2903
      %v2975 = vadd.f32 %v2680, %v2906
      %v2976 = vadd.f32 %v2681, %v2909
      %v2977 = vadd.f32 %v2682, %v2912
      %v2978 = vadd.f32 %v2683, %v2915
      %v2979 = vadd.f32 %v2684, %v2918
      %v2980 = vadd.f32 %v2685, %v2921
      %v2981 = vadd.f32 %v2686, %v2924
      %v2982 = vadd.f32 %v2687, %v2927
      %v2983 = vadd.f32 %v2688, %v2930
      %v2984 = vadd.f32 %v2689, %v2933
      %v2985 = vadd.f32 %v2690, %v2936
      %v2986 = vadd.f32 %v2691, %v2939
      %v2987 = vadd.f32 %v2692, %v2942
      %v2988 = vadd.f32 %v2693, %v2945
      %v2989 = vadd.f32 %v2694, %v2948
      %v2990 = vadd.f32 %v2695, %v2951
      %v2991 = vadd.f32 %v2696, %v2954
      %v2992 = vadd.f32 %v2697, %v2957
      %v2993 = vadd.f32 %v2698, %v2960
      %v2994 = vld [vmem:[%s2] sm:$0x1]
      %v2996 = vperm.slane %v2994, 0
      %v2998 = vadd.f32 %v2962, %v2996
      %v2999 = vadd.f32 %v2963, %v2996
      %v3000 = vadd.f32 %v2964, %v2996
      %v3001 = vadd.f32 %v2965, %v2996
      %v3002 = vadd.f32 %v2966, %v2996
      %v3003 = vadd.f32 %v2967, %v2996
      %v3004 = vadd.f32 %v2968, %v2996
      %v3005 = vadd.f32 %v2969, %v2996
      %v3006 = vadd.f32 %v2970, %v2996
      %v3007 = vadd.f32 %v2971, %v2996
      %v3008 = vadd.f32 %v2972, %v2996
      %v3009 = vadd.f32 %v2973, %v2996
      %v3010 = vadd.f32 %v2974, %v2996
      %v3011 = vadd.f32 %v2975, %v2996
      %v3012 = vadd.f32 %v2976, %v2996
      %v3013 = vadd.f32 %v2977, %v2996
      %v3014 = vadd.f32 %v2978, %v2996
      %v3015 = vadd.f32 %v2979, %v2996
      %v3016 = vadd.f32 %v2980, %v2996
      %v3017 = vadd.f32 %v2981, %v2996
      %v3018 = vadd.f32 %v2982, %v2996
      %v3019 = vadd.f32 %v2983, %v2996
      %v3020 = vadd.f32 %v2984, %v2996
      %v3021 = vadd.f32 %v2985, %v2996
      %v3022 = vadd.f32 %v2986, %v2996
      %v3023 = vadd.f32 %v2987, %v2996
      %v3024 = vadd.f32 %v2988, %v2996
      %v3025 = vadd.f32 %v2989, %v2996
      %v3026 = vadd.f32 %v2990, %v2996
      %v3027 = vadd.f32 %v2991, %v2996
      %v3028 = vadd.f32 %v2992, %v2996
      %v3029 = vadd.f32 %v2993, %v2996
      %vm3030 = vcmp.gt.f32.partialorder %v2998, 0.0
      %vm3031 = vcmp.gt.f32.partialorder %v2999, 0.0
      %vm3032 = vcmp.gt.f32.partialorder %v3000, 0.0
      %vm3033 = vcmp.gt.f32.partialorder %v3001, 0.0
      %vm3034 = vcmp.gt.f32.partialorder %v3002, 0.0
      %vm3035 = vcmp.gt.f32.partialorder %v3003, 0.0
      %vm3036 = vcmp.gt.f32.partialorder %v3004, 0.0
      %vm3037 = vcmp.gt.f32.partialorder %v3005, 0.0
      %vm3038 = vcmp.gt.f32.partialorder %v3006, 0.0
      %vm3039 = vcmp.gt.f32.partialorder %v3007, 0.0
      %vm3040 = vcmp.gt.f32.partialorder %v3008, 0.0
      %vm3041 = vcmp.gt.f32.partialorder %v3009, 0.0
      %vm3042 = vcmp.gt.f32.partialorder %v3010, 0.0
      %vm3043 = vcmp.gt.f32.partialorder %v3011, 0.0
      %vm3044 = vcmp.gt.f32.partialorder %v3012, 0.0
      %vm3045 = vcmp.gt.f32.partialorder %v3013, 0.0
      %vm3046 = vcmp.gt.f32.partialorder %v3014, 0.0
      %vm3047 = vcmp.gt.f32.partialorder %v3015, 0.0
      %vm3048 = vcmp.gt.f32.partialorder %v3016, 0.0
      %vm3049 = vcmp.gt.f32.partialorder %v3017, 0.0
      %vm3050 = vcmp.gt.f32.partialorder %v3018, 0.0
      %vm3051 = vcmp.gt.f32.partialorder %v3019, 0.0
      %vm3052 = vcmp.gt.f32.partialorder %v3020, 0.0
      %vm3053 = vcmp.gt.f32.partialorder %v3021, 0.0
      %vm3054 = vcmp.gt.f32.partialorder %v3022, 0.0
      %vm3055 = vcmp.gt.f32.partialorder %v3023, 0.0
      %vm3056 = vcmp.gt.f32.partialorder %v3024, 0.0
      %vm3057 = vcmp.gt.f32.partialorder %v3025, 0.0
      %vm3058 = vcmp.gt.f32.partialorder %v3026, 0.0
      %vm3059 = vcmp.gt.f32.partialorder %v3027, 0.0
      %vm3060 = vcmp.gt.f32.partialorder %v3028, 0.0
      %vm3061 = vcmp.gt.f32.partialorder %v3029, 0.0
      %v3062 = vmul.f32 %v2998, 0.1
      %v3063 = vmul.f32 %v2999, 0.1
      %v3064 = vmul.f32 %v3000, 0.1
      %v3065 = vmul.f32 %v3001, 0.1
      %v3066 = vmul.f32 %v3002, 0.1
      %v3067 = vmul.f32 %v3003, 0.1
      %v3068 = vmul.f32 %v3004, 0.1
      %v3069 = vmul.f32 %v3005, 0.1
      %v3070 = vmul.f32 %v3006, 0.1
      %v3071 = vmul.f32 %v3007, 0.1
      %v3072 = vmul.f32 %v3008, 0.1
      %v3073 = vmul.f32 %v3009, 0.1
      %v3074 = vmul.f32 %v3010, 0.1
      %v3075 = vmul.f32 %v3011, 0.1
      %v3076 = vmul.f32 %v3012, 0.1
      %v3077 = vmul.f32 %v3013, 0.1
      %v3078 = vmul.f32 %v3014, 0.1
      %v3079 = vmul.f32 %v3015, 0.1
      %v3080 = vmul.f32 %v3016, 0.1
      %v3081 = vmul.f32 %v3017, 0.1
      %v3082 = vmul.f32 %v3018, 0.1
      %v3083 = vmul.f32 %v3019, 0.1
      %v3084 = vmul.f32 %v3020, 0.1
      %v3085 = vmul.f32 %v3021, 0.1
      %v3086 = vmul.f32 %v3022, 0.1
      %v3087 = vmul.f32 %v3023, 0.1
      %v3088 = vmul.f32 %v3024, 0.1
      %v3089 = vmul.f32 %v3025, 0.1
      %v3090 = vmul.f32 %v3026, 0.1
      %v3091 = vmul.f32 %v3027, 0.1
      %v3092 = vmul.f32 %v3028, 0.1
      %v3093 = vmul.f32 %v3029, 0.1
      %v3094 = vsel %vm3030, %v2998, %v3062
      %v3095 = vsel %vm3031, %v2999, %v3063
      %v3096 = vsel %vm3032, %v3000, %v3064
      %v3097 = vsel %vm3033, %v3001, %v3065
      %v3098 = vsel %vm3034, %v3002, %v3066
      %v3099 = vsel %vm3035, %v3003, %v3067
      %v3100 = vsel %vm3036, %v3004, %v3068
      %v3101 = vsel %vm3037, %v3005, %v3069
      %v3102 = vsel %vm3038, %v3006, %v3070
      %v3103 = vsel %vm3039, %v3007, %v3071
      %v3104 = vsel %vm3040, %v3008, %v3072
      %v3105 = vsel %vm3041, %v3009, %v3073
      %v3106 = vsel %vm3042, %v3010, %v3074
      %v3107 = vsel %vm3043, %v3011, %v3075
      %v3108 = vsel %vm3044, %v3012, %v3076
      %v3109 = vsel %vm3045, %v3013, %v3077
      %v3110 = vsel %vm3046, %v3014, %v3078
      %v3111 = vsel %vm3047, %v3015, %v3079
      %v3112 = vsel %vm3048, %v3016, %v3080
      %v3113 = vsel %vm3049, %v3017, %v3081
      %v3114 = vsel %vm3050, %v3018, %v3082
      %v3115 = vsel %vm3051, %v3019, %v3083
      %v3116 = vsel %vm3052, %v3020, %v3084
      %v3117 = vsel %vm3053, %v3021, %v3085
      %v3118 = vsel %vm3054, %v3022, %v3086
      %v3119 = vsel %vm3055, %v3023, %v3087
      %v3120 = vsel %vm3056, %v3024, %v3088
      %v3121 = vsel %vm3057, %v3025, %v3089
      %v3122 = vsel %vm3058, %v3026, %v3090
      %v3123 = vsel %vm3059, %v3027, %v3091
      %v3124 = vsel %vm3060, %v3028, %v3092
      %v3125 = vsel %vm3061, %v3029, %v3093
      %3126 = vst [vmem:[%s194] sm:$0xff] %v3094
      %3127 = vst [vmem:[%s194 + $0x8] sm:$0xff] %v3095
      %3128 = vst [vmem:[%s194 + $0x10] sm:$0xff] %v3096
      %3129 = vst [vmem:[%s194 + $0x18] sm:$0xff] %v3097
      %3130 = vst [vmem:[%s194 + $0x20] sm:$0xff] %v3098
      %3131 = vst [vmem:[%s194 + $0x28] sm:$0xff] %v3099
      %3132 = vst [vmem:[%s194 + $0x30] sm:$0xff] %v3100
      %3133 = vst [vmem:[%s194 + $0x38] sm:$0xff] %v3101
      %3134 = vst [vmem:[%s194 + $0x40] sm:$0xff] %v3102
      %3135 = vst [vmem:[%s194 + $0x48] sm:$0xff] %v3103
      %3136 = vst [vmem:[%s194 + $0x50] sm:$0xff] %v3104
      %3137 = vst [vmem:[%s194 + $0x58] sm:$0xff] %v3105
      %3138 = vst [vmem:[%s194 + $0x60] sm:$0xff] %v3106
      %3139 = vst [vmem:[%s194 + $0x68] sm:$0xff] %v3107
      %3140 = vst [vmem:[%s194 + $0x70] sm:$0xff] %v3108
      %3141 = vst [vmem:[%s194 + $0x78] sm:$0xff] %v3109
      %3142 = vst [vmem:[%s194 + $0x80] sm:$0xff] %v3110
      %3143 = vst [vmem:[%s194 + $0x88] sm:$0xff] %v3111
      %3144 = vst [vmem:[%s194 + $0x90] sm:$0xff] %v3112
      %3145 = vst [vmem:[%s194 + $0x98] sm:$0xff] %v3113
      %3146 = vst [vmem:[%s194 + $0xa0] sm:$0xff] %v3114
      %3147 = vst [vmem:[%s194 + $0xa8] sm:$0xff] %v3115
      %3148 = vst [vmem:[%s194 + $0xb0] sm:$0xff] %v3116
      %3149 = vst [vmem:[%s194 + $0xb8] sm:$0xff] %v3117
      %3150 = vst [vmem:[%s194 + $0xc0] sm:$0xff] %v3118
      %3151 = vst [vmem:[%s194 + $0xc8] sm:$0xff] %v3119
      %3152 = vst [vmem:[%s194 + $0xd0] sm:$0xff] %v3120
      %3153 = vst [vmem:[%s194 + $0xd8] sm:$0xff] %v3121
      %3154 = vst [vmem:[%s194 + $0xe0] sm:$0xff] %v3122
      %3155 = vst [vmem:[%s194 + $0xe8] sm:$0xff] %v3123
      %3156 = vst [vmem:[%s194 + $0xf0] sm:$0xff] %v3124
      %3157 = vst [vmem:[%s194 + $0xf8] sm:$0xff] %v3125
      %s3158 = smul.u32 16, %s19
      %p3159 = scmp.lt.s32.totalorder %s18, 1
      %s3160 = scalar_select %p3159, %s18, 1
      %p3161 = scmp.lt.s32.totalorder %s3158, 15
      %s3162 = scalar_select %p3161, %s3158, 15
      %s3163 = smul.addr %s3162, 2
      %s3164 = smul.addr %s3160, 32
      %s3165 = sadd.s32 %s3163, %s3164
      %s3166 = smul.addr %s3165, 8
      %s3167 = scalar_lea.vmem %s3, %s3166
      // Predicated region
      $region33: #{conv_bn_act.1} parent=31 // pred_check
        %p3168 = pneg %p114
      $region34: #{conv_bn_act.1} parent=31 // pred_check_branch
        %3170 = sbr.rel (%p3168) target = $region36
      $region35: #{conv_bn_act.1} parent=31 // pred_region
        %s3171 = smul.u32 16, %s19
      $region36: #{conv_bn_act.1} parent=31 // pred_fallthru
        _
    $region32: #{conv_bn_act.1} parent=5 // pred_fallthru
      _
    %p3172 = scmp.le.s32.totalorder 2, %s9
    // Predicated region
    $region37: #{conv_bn_act.1} parent=5 // pred_check
      %p3173 = pneg %p3172
    $region38: #{conv_bn_act.1} parent=5 // pred_check_branch
      %3175 = sbr.rel (%p3173) target = $region40
    $region39: #{conv_bn_act.1} parent=5 // pred_region
      %s3176 = ssub.s32 %s9, 2
      // Predicated region
      $region41: #{conv_bn_act.1} parent=39 // pred_check
        %p3177 = pneg %p120
      $region42: #{conv_bn_act.1} parent=39 // pred_check_branch
        %3179 = sbr.rel (%p3177) target = $region44
      $region43: #{conv_bn_act.1} parent=39 // pred_region
        %s3180 = smul.u32 16, %s21
        %p3181 = scmp.lt.s32.totalorder %s20, 1
        %s3182 = scalar_select %p3181, %s20, 1
        %p3183 = scmp.lt.s32.totalorder %s3180, 15
        %s3184 = scalar_select %p3183, %s3180, 15
        %s3185 = smul.addr %s3184, 2
        %s3186 = smul.addr %s3182, 32
        %s3187 = sadd.s32 %s3185, %s3186
        %s3188 = smul.addr %s3187, 8
        %s3189 = scalar_lea.vmem %s3, %s3188
      $region44: #{conv_bn_act.1} parent=39 // pred_fallthru
        _
    $region40: #{conv_bn_act.1} parent=5 // pred_fallthru
      _
  $region6: #{conv_bn_act.1} parent=0 // loop_footer
    %s13 = sadd.s32 1, %s9
  $region7: #{conv_bn_act.1} parent=0 // loop_footer_branch
    %8 = sbr.rel target = $region3
  $region8: #{conv_bn_act.1} parent=0 // loop_exit
    _

</llo_original>
